<compile_context>
chip_gen: v5e
topology: v5e:2x2
jax: 0.10.0
libtpu: 0.0.40
codegen_flags: <defaults>
</compile_context>

<pallas_src>
import math

import jax
import jax.numpy as jnp
from jax.experimental import pallas as pl
from jax.experimental.pallas import tpu as pltpu

_BN_EPS = 1e-5
_LANE = 128


def _round_up(x, m):
    return (x + m - 1) // m * m


# --------------------- per-generation tiling / VMEM budget ------------------ #

_DEVICE_KIND = None
_VMEM_BUDGET = None


def _device_kind():
    global _DEVICE_KIND
    if _DEVICE_KIND is None:
        try:
            _DEVICE_KIND = jax.devices()[0].device_kind.lower()
        except Exception:
            _DEVICE_KIND = ""
    return _DEVICE_KIND


def _vmem_budget():
    """Scoped-VMEM request, sized per TPU generation (conservative headroom)."""
    global _VMEM_BUDGET
    if _VMEM_BUDGET is None:
        kind = _device_kind()
        if "v7" in kind:                      # 64 MiB physical VMEM
            _VMEM_BUDGET = 48 * 1024 * 1024
        elif "v5" in kind or "v6" in kind:    # 128 MiB physical VMEM
            _VMEM_BUDGET = 96 * 1024 * 1024
        elif "v2" in kind or "v3" in kind:
            _VMEM_BUDGET = 12 * 1024 * 1024
        else:
            _VMEM_BUDGET = 48 * 1024 * 1024
    return _VMEM_BUDGET


def _choose_tile_n(n_pad):
    kind = _device_kind()
    if n_pad % 256 == 0 and ("v6" in kind or "v7" in kind):
        return 256                            # fill the 2x256^2 MXU N dim
    return _LANE


def _choose_tile_m(m_pad, k, tile_n):
    """Largest M tile (multiple of 8) whose double-buffered working set fits."""
    budget = _vmem_budget()
    fixed = 2 * (k * tile_n * 2 + 8 * tile_n * 4)     # weights + stats blocks
    per_row = 2 * (k * 2 + tile_n * 2)                # patches(bf16) + y(bf16)
    avail = max(budget // 2 - fixed, 1 << 20)
    tm = max(8, min(avail // per_row, m_pad, 1024))
    tm = (tm // 8) * 8
    return max(tm, 8)


# ----------------------------- Pallas kernels ------------------------------ #

def _mm_stats_kernel(x_ref, w_ref, y_ref, st_ref):
    """bf16 matmul (f32 acc) -> bf16 output + per-column sum / sumsq stats."""
    y = jnp.dot(x_ref[...], w_ref[...], preferred_element_type=jnp.float32)
    y_ref[...] = y.astype(jnp.bfloat16)
    tn = y.shape[1]
    s = jnp.sum(y, axis=0, keepdims=True)             # (1, tn)
    ss = jnp.sum(y * y, axis=0, keepdims=True)        # (1, tn)
    row = jax.lax.broadcasted_iota(jnp.int32, (8, tn), 0)
    st = jnp.where(row == 0, s, 0.0) + jnp.where(row == 1, ss, 0.0)
    st_ref[...] = st.reshape(1, 8, tn)


def _scale_shift_relu_kernel(y_ref, s_ref, t_ref, o_ref):
    """Per-column scale/shift (folded BatchNorm) + ReLU, bf16 in / bf16 out."""
    y = y_ref[...].astype(jnp.float32)
    o_ref[...] = jnp.maximum(y * s_ref[...] + t_ref[...], 0.0).astype(jnp.bfloat16)


def _bn_relu(y, gamma, beta):
    """Training-mode BN over rows (whole block resident), folded scale/shift."""
    inv_m = 1.0 / y.shape[0]
    mean = jnp.sum(y, axis=0, keepdims=True) * inv_m
    ex2 = jnp.sum(y * y, axis=0, keepdims=True) * inv_m
    var = jnp.maximum(ex2 - mean * mean, 0.0)
    s = gamma * jax.lax.rsqrt(var + _BN_EPS)
    t = beta - mean * s
    return jnp.maximum(y * s + t, 0.0)


def _make_mlp_head_kernel(n_hidden):
    """Fused [Linear+BN+ReLU]*n_hidden + Linear(+bias) head, one kernel."""
    def kernel(*refs):
        act = refs[0][...]                            # (M, K) bf16
        idx = 1
        for _ in range(n_hidden):
            w_ref, g_ref, b_ref = refs[idx], refs[idx + 1], refs[idx + 2]
            idx += 3
            y = jnp.dot(act.astype(jnp.bfloat16), w_ref[...],
                        preferred_element_type=jnp.float32)
            act = _bn_relu(y, g_ref[...], b_ref[...])
        wf_ref, bf_ref, o_ref = refs[idx], refs[idx + 1], refs[idx + 2]
        o_ref[...] = jnp.dot(act.astype(jnp.bfloat16), wf_ref[...],
                             preferred_element_type=jnp.float32) + bf_ref[...]
    return kernel


# ----------------------------- kernel wrappers ------------------------------ #

def _matmul_stats(x, w_mat, tile_m, tile_n):
    m_pad, k = x.shape
    n_pad = w_mat.shape[1]
    gm, gn = m_pad // tile_m, n_pad // tile_n
    return pl.pallas_call(
        _mm_stats_kernel,
        out_shape=(jax.ShapeDtypeStruct((m_pad, n_pad), jnp.bfloat16),
                   jax.ShapeDtypeStruct((gm, 8, n_pad), jnp.float32)),
        grid_spec=pltpu.PrefetchScalarGridSpec(
            num_scalar_prefetch=0,
            grid=(gm, gn),
            in_specs=[
                pl.BlockSpec((tile_m, k), lambda i, j: (i, 0)),
                pl.BlockSpec((k, tile_n), lambda i, j: (0, j)),
            ],
            out_specs=[
                pl.BlockSpec((tile_m, tile_n), lambda i, j: (i, j)),
                pl.BlockSpec((1, 8, tile_n), lambda i, j: (i, 0, j)),
            ],
        ),
        compiler_params=pltpu.CompilerParams(
            dimension_semantics=("parallel", "parallel"),
            vmem_limit_bytes=_vmem_budget(),
        ),
    )(x, w_mat)


def _apply_bn_relu(y, scale, shift, tile_m, tile_n):
    m_pad, n_pad = y.shape
    gm, gn = m_pad // tile_m, n_pad // tile_n
    return pl.pallas_call(
        _scale_shift_relu_kernel,
        out_shape=jax.ShapeDtypeStruct((m_pad, n_pad), jnp.bfloat16),
        grid_spec=pltpu.PrefetchScalarGridSpec(
            num_scalar_prefetch=0,
            grid=(gm, gn),
            in_specs=[
                pl.BlockSpec((tile_m, tile_n), lambda i, j: (i, j)),
                pl.BlockSpec((1, tile_n), lambda i, j: (0, j)),
                pl.BlockSpec((1, tile_n), lambda i, j: (0, j)),
            ],
            out_specs=pl.BlockSpec((tile_m, tile_n), lambda i, j: (i, j)),
        ),
        compiler_params=pltpu.CompilerParams(
            dimension_semantics=("parallel", "parallel"),
            vmem_limit_bytes=_vmem_budget(),
        ),
    )(y, scale, shift)


def tiled_linear_bn_relu(x_bf16, w_pad_bf16, gamma_pad, beta_pad):
    """(M, K) bf16 @ (K, Npad) bf16, training-mode BN over rows, ReLU -> bf16.

    Tiled over (M, N); per-tile partial stats are reduced in cheap XLA math
    (tiny, Npad-sized) and applied by a second lane-dense bf16 pass.
    """
    m, k = x_bf16.shape
    n_pad = w_pad_bf16.shape[1]
    tile_n = _choose_tile_n(n_pad)
    m8 = _round_up(m, 8)
    tile_m = _choose_tile_m(m8, k, tile_n)
    m_pad = _round_up(m8, tile_m)
    x = jnp.pad(x_bf16, ((0, m_pad - m), (0, 0)))     # zero rows: 0 to stats
    y, stats = _matmul_stats(x, w_pad_bf16, tile_m, tile_n)
    col_sum = jnp.sum(stats[:, 0, :], axis=0)
    col_ssq = jnp.sum(stats[:, 1, :], axis=0)
    mean = col_sum / m                                # normalize by REAL M
    var = jnp.maximum(col_ssq / m - mean * mean, 0.0)
    scale = gamma_pad * jax.lax.rsqrt(var + _BN_EPS)
    shift = beta_pad - mean * scale
    out = _apply_bn_relu(y, scale.reshape(1, n_pad), shift.reshape(1, n_pad),
                         tile_m, tile_n)
    return out[:m]


def _head_vmem_bytes(h_shape, layers, final_w):
    m = h_shape[0]
    total = m * h_shape[1] * 2
    for (w, g, b) in layers:
        total += w.size * 2 + g.size * 4 + b.size * 4 + m * w.shape[1] * 4
    total += final_w.size * 2 + 2 * m * final_w.shape[1] * 4
    return total


def mlp_head(h, layers, final_w, final_b):
    """MLP head.  Fully fused when it fits the per-generation VMEM budget;
    otherwise leading layers are peeled through the tiled matmul+BN path."""
    layers = list(layers)
    budget = _vmem_budget()
    while layers and _head_vmem_bytes(h.shape, layers, final_w) > budget // 2:
        w, g, b = layers.pop(0)
        h = tiled_linear_bn_relu(h, w, g[0], b[0])
    args = [h]
    for (w, g, b) in layers:
        args += [w, g, b]
    args += [final_w, final_b]
    m = h.shape[0]
    n_out = final_w.shape[1]
    return pl.pallas_call(
        _make_mlp_head_kernel(len(layers)),
        out_shape=jax.ShapeDtypeStruct((m, n_out), jnp.float32),
        in_specs=[pl.BlockSpec(memory_space=pltpu.MemorySpace.VMEM)] * len(args),
        out_specs=pl.BlockSpec(memory_space=pltpu.MemorySpace.VMEM),
        compiler_params=pltpu.CompilerParams(vmem_limit_bytes=budget),
    )(*args)


# ------------------------------- JAX glue ----------------------------------- #

def _im2col_stride2(x_ndhwc):
    """im2col for Conv3d(kernel=3, stride=2, padding=1) on NDHWC (bf16) input.

    Returns (patches, dims): patches is (N*Do*Ho*Wo, 27*C), inner order
    (kd, kh, kw, c_in), rows in (n, do, ho, wo) order.
    """
    n, d, h, w, c = x_ndhwc.shape
    do, ho, wo = -(-d // 2), -(-h // 2), -(-w // 2)
    xp = jnp.pad(x_ndhwc, ((0, 0), (1, 1), (1, 1), (1, 1), (0, 0)))
    taps = []
    for kd in range(3):
        for kh in range(3):
            for kw in range(3):
                taps.append(xp[:, kd:kd + 2 * do:2,
                               kh:kh + 2 * ho:2,
                               kw:kw + 2 * wo:2, :])
    patches = jnp.stack(taps, axis=4)                 # (N, Do, Ho, Wo, 27, C)
    return patches.reshape(n * do * ho * wo, 27 * c), (n, do, ho, wo)


def preprocess_params(params, nc, img_size, ds_factor):
    """One-time weight prep (transpose / pad / bf16), hoisted out of forward."""
    conv_params, linear_params, final_w, final_b = params

    conv_proc = []
    for (w, _b_cancelled, gamma, beta) in conv_params:
        c_out, c_in = int(w.shape[0]), int(w.shape[1])
        k = 27 * c_in
        k_pad = _round_up(k, _LANE)
        n_pad = _round_up(c_out, _LANE)
        # (C_out, C_in, kd, kh, kw) -> (kd, kh, kw, C_in, C_out) -> (27*C_in, C_out)
        w_mat = jnp.transpose(w, (2, 3, 4, 1, 0)).reshape(k, c_out)
        w_mat = jnp.pad(w_mat, ((0, k_pad - k),
                                (0, n_pad - c_out))).astype(jnp.bfloat16)
        g = jnp.pad(gamma, (0, n_pad - c_out), constant_values=1.0)
        b = jnp.pad(beta, (0, n_pad - c_out))
        conv_proc.append((w_mat, g, b))

    dims = list(img_size)
    for _ in range(ds_factor):
        dims = [-(-s // 2) for s in dims]
    do, ho, wo = dims
    n_vis = do * ho * wo * nc
    fold_ndhwc = ds_factor > 0

    mlp_layers = []
    k_cur = n_vis
    for li, (w, _b_cancelled, gamma, beta) in enumerate(linear_params):
        out_dim, in_dim = int(w.shape[0]), int(w.shape[1])
        wt = jnp.transpose(w)                         # (in_dim, out_dim)
        if li == 0 and fold_ndhwc:
            # Fold PyTorch's NCDHW flatten into the first weight's row order.
            wt = wt.reshape(nc, do, ho, wo, out_dim)
            wt = jnp.transpose(wt, (1, 2, 3, 0, 4)).reshape(in_dim, out_dim)
        out_pad = _round_up(out_dim, _LANE)
        wt = jnp.pad(wt, ((0, k_cur - in_dim),
                          (0, out_pad - out_dim))).astype(jnp.bfloat16)
        g = jnp.pad(gamma.reshape(1, out_dim), ((0, 0), (0, out_pad - out_dim)),
                    constant_values=1.0)
        b = jnp.pad(beta.reshape(1, out_dim), ((0, 0), (0, out_pad - out_dim)))
        mlp_layers.append((wt, g, b))
        k_cur = out_pad

    f_out, f_in = int(final_w.shape[0]), int(final_w.shape[1])
    f_pad = _round_up(f_out, _LANE)
    wf = jnp.pad(jnp.transpose(final_w),
                 ((0, k_cur - f_in), (0, f_pad - f_out))).astype(jnp.bfloat16)
    bf_ = jnp.pad(final_b.reshape(1, f_out), ((0, 0), (0, f_pad - f_out)))
    return (conv_proc, mlp_layers, wf, bf_)


def disease_classifier_forward(x_ncdhw, proc):
    conv_proc, mlp_layers, wf, bf_ = proc
    nc = x_ncdhw.shape[1]

    x = jnp.transpose(x_ncdhw, (0, 2, 3, 4, 1)).astype(jnp.bfloat16)   # NDHWC

    for (w_mat, gamma, beta) in conv_proc:
        k_pad, n_pad = w_mat.shape
        c_out = nc                                     # Conv3d(nc, nc, ...)
        patches, (n_b, do, ho, wo) = _im2col_stride2(x)
        m, k = patches.shape
        patches = jnp.pad(patches, ((0, 0), (0, k_pad - k)))            # bf16
        y = tiled_linear_bn_relu(patches, w_mat, gamma, beta)  # (m, n_pad) bf16
        # Slice on the bf16 kernel output (cheap for tiny c_out).
        x = y.reshape(n_b, do, ho, wo, n_pad)[..., :c_out]

    if conv_proc:
        h = x.reshape(x.shape[0], -1)                  # NDHWC-flat, bf16
    else:
        h = x_ncdhw.reshape(x_ncdhw.shape[0], -1).astype(jnp.bfloat16)

    out_p = mlp_head(h, mlp_layers, wf, bf_)           # (batch, f_pad) f32
    return out_p[:, :1]


# --------------------------- parameter construction ------------------------- #

def init_params(key, nc, img_size, ds_factor, n_hid):
    conv_params = []
    for _ in range(ds_factor):
        key, k1, k2 = jax.random.split(key, 3)
        w = 0.1 * jax.random.normal(k1, (nc, nc, 3, 3, 3), jnp.float32)
        b = 0.01 * jax.random.normal(k2, (nc,), jnp.float32)   # cancelled by BN
        conv_params.append((w, b,
                            jnp.ones((nc,), jnp.float32),
                            jnp.zeros((nc,), jnp.float32)))

    prev_size = list(img_size)
    for _ in range(ds_factor):
        prev_size = [-(-s // 2) for s in prev_size]
    n_vis = int(math.prod(prev_size)) * nc

    linear_params = []
    prev = n_vis
    for hdim in n_hid:
        key, k1, k2 = jax.random.split(key, 3)
        w = 0.1 * jax.random.normal(k1, (hdim, prev), jnp.float32)   # (out, in)
        b = 0.01 * jax.random.normal(k2, (hdim,), jnp.float32)       # cancelled
        linear_params.append((w, b,
                              jnp.ones((hdim,), jnp.float32),
                              jnp.zeros((hdim,), jnp.float32)))
        prev = hdim

    key, k1, k2 = jax.random.split(key, 3)
    final_w = 0.1 * jax.random.normal(k1, (1, prev), jnp.float32)
    final_b = 0.01 * jax.random.normal(k2, (1,), jnp.float32)
    return (conv_params, linear_params, final_w, final_b), n_vis


# ---------------------------------- main ------------------------------------ #

if __name__ == "__main__":
    batch = 2
    nc = 4
    img_size = [8, 8, 8]
    ds_factor = 2
    n_hid = [32, 16]

    key = jax.random.PRNGKey(0)
    key, kx = jax.random.split(key)
    # PyTorch Conv3d input layout: (N, C, D, H, W)
    x = jax.random.normal(kx, (batch, nc, *img_size), jnp.float32)

    params, n_vis = init_params(key, nc, img_size, ds_factor, n_hid)
    assert n_vis == 2 * 2 * 2 * nc

    proc = preprocess_params(params, nc, img_size, ds_factor)   # once, outside jit

    fwd = jax.jit(disease_classifier_forward)
    out = jax.block_until_ready(fwd(x, proc))

    assert out.shape == (batch, 1), out.shape
    assert jnp.all(jnp.isfinite(out))
    print("KERNEL_OK")
</pallas_src>

<mosaic_0001>
module attributes {stable_mosaic.version = 11 : i64} {
  func.func @_mm_stats_kernel(%arg0: i32, %arg1: i32, %arg2: memref<128x128xbf16, #tpu.memory_space<vmem>>, %arg3: memref<128x128xbf16, #tpu.memory_space<vmem>>, %arg4: memref<128x128xbf16, #tpu.memory_space<vmem>>, %arg5: memref<1x8x128xf32, #tpu.memory_space<vmem>>) attributes {dimension_semantics = [#tpu.dimension_semantics<parallel>, #tpu.dimension_semantics<parallel>], iteration_bounds = array<i64: 1, 1>, scalar_prefetch = 0 : i64, scratch_operands = 0 : i64, tpu.core_type = #tpu.core_type<tc>, window_params = [{transform_indices = @transform_0, window_bounds = array<i64: 128, 128>}, {transform_indices = @transform_1, window_bounds = array<i64: 128, 128>}, {transform_indices = @transform_2, window_bounds = array<i64: 128, 128>}, {transform_indices = @transform_3, window_bounds = array<i64: 1, 8, 128>}]} {
    %c0 = arith.constant 0 : index
    %c0_0 = arith.constant 0 : index
    %0 = vector.load %arg2[%c0, %c0_0] : memref<128x128xbf16, #tpu.memory_space<vmem>>, vector<128x128xbf16>
    %c0_1 = arith.constant 0 : index
    %c0_2 = arith.constant 0 : index
    %1 = vector.load %arg3[%c0_1, %c0_2] : memref<128x128xbf16, #tpu.memory_space<vmem>>, vector<128x128xbf16>
    %cst = arith.constant dense<0.000000e+00> : vector<128x128xf32>
    %2 = tpu.matmul %0, %1, %cst {dimension_numbers = #tpu.dot_dimension_numbers<[1], [0], [0], [1], [0, 0, 1, 1], [], []>} : vector<128x128xbf16>, vector<128x128xbf16>, vector<128x128xf32> -> vector<128x128xf32>
    %3 = arith.truncf %2 : vector<128x128xf32> to vector<128x128xbf16>
    %c0_3 = arith.constant 0 : index
    %c0_4 = arith.constant 0 : index
    %4 = vector.load %arg4[%c0_3, %c0_4] : memref<128x128xbf16, #tpu.memory_space<vmem>>, vector<128x128xbf16>
    tpu.vector_store %arg4[%c0_3, %c0_4], %3 {strides = array<i32>} : memref<128x128xbf16, #tpu.memory_space<vmem>>, vector<128x128xbf16>,
    %cst_5 = arith.constant dense<0.000000e+00> : vector<128xf32>
    %5 = vector.multi_reduction <add>, %2, %cst_5 [0] : vector<128x128xf32> to vector<128xf32>
    %6 = vector.shape_cast %5 : vector<128xf32> to vector<1x128xf32>
    %7 = arith.mulf %2, %2 : vector<128x128xf32>
    %cst_6 = arith.constant dense<0.000000e+00> : vector<128xf32>
    %8 = vector.multi_reduction <add>, %7, %cst_6 [0] : vector<128x128xf32> to vector<128xf32>
    %9 = vector.shape_cast %8 : vector<128xf32> to vector<1x128xf32>
    %10 = tpu.iota {dimensions = array<i32: 0>} : vector<8x128xi32>
    %c0_i32 = arith.constant 0 : i32
    %11 = vector.broadcast %c0_i32 : i32 to vector<8x128xi32>
    %12 = arith.cmpi eq, %10, %11 : vector<8x128xi32>
    %cst_7 = arith.constant 0.000000e+00 : f32
    %13 = vector.shape_cast %6 : vector<1x128xf32> to vector<1x128xf32>
    %14 = vector.broadcast %13 : vector<1x128xf32> to vector<8x128xf32>
    %15 = vector.broadcast %cst_7 : f32 to vector<8x128xf32>
    %16 = arith.select %12, %14, %15 : vector<8x128xi1>, vector<8x128xf32>
    %c1_i32 = arith.constant 1 : i32
    %17 = vector.broadcast %c1_i32 : i32 to vector<8x128xi32>
    %18 = arith.cmpi eq, %10, %17 : vector<8x128xi32>
    %cst_8 = arith.constant 0.000000e+00 : f32
    %19 = vector.shape_cast %9 : vector<1x128xf32> to vector<1x128xf32>
    %20 = vector.broadcast %19 : vector<1x128xf32> to vector<8x128xf32>
    %21 = vector.broadcast %cst_8 : f32 to vector<8x128xf32>
    %22 = arith.select %18, %20, %21 : vector<8x128xi1>, vector<8x128xf32>
    %23 = arith.addf %16, %22 : vector<8x128xf32>
    %24 = vector.shape_cast %23 : vector<8x128xf32> to vector<1x8x128xf32>
    %c0_9 = arith.constant 0 : index
    %c0_10 = arith.constant 0 : index
    %c0_11 = arith.constant 0 : index
    %25 = vector.load %arg5[%c0_9, %c0_10, %c0_11] : memref<1x8x128xf32, #tpu.memory_space<vmem>>, vector<1x8x128xf32>
    tpu.vector_store %arg5[%c0_9, %c0_10, %c0_11], %24 {strides = array<i32>} : memref<1x8x128xf32, #tpu.memory_space<vmem>>, vector<1x8x128xf32>,
    return
  }
  func.func @transform_0(%arg0: i32, %arg1: i32) -> (i32, i32) {
    %c0_i32 = arith.constant 0 : i32
    %c0_i32_0 = arith.constant 0 : i32
    return %arg0, %c0_i32 : i32, i32
  }
  func.func @transform_1(%arg0: i32, %arg1: i32) -> (i32, i32) {
    %c0_i32 = arith.constant 0 : i32
    %c0_i32_0 = arith.constant 0 : i32
    return %c0_i32, %arg1 : i32, i32
  }
  func.func @transform_2(%arg0: i32, %arg1: i32) -> (i32, i32) {
    %c0_i32 = arith.constant 0 : i32
    return %arg0, %arg1 : i32, i32
  }
  func.func @transform_3(%arg0: i32, %arg1: i32) -> (i32, i32, i32) {
    %c0_i32 = arith.constant 0 : i32
    %c0_i32_0 = arith.constant 0 : i32
    return %arg0, %c0_i32, %arg1 : i32, i32, i32
  }
}

module attributes {stable_mosaic.version = 11 : i64} {
  func.func @_scale_shift_relu_kernel(%arg0: i32, %arg1: i32, %arg2: memref<128x128xbf16, #tpu.memory_space<vmem>>, %arg3: memref<1x128xf32, #tpu.memory_space<vmem>>, %arg4: memref<1x128xf32, #tpu.memory_space<vmem>>, %arg5: memref<128x128xbf16, #tpu.memory_space<vmem>>) attributes {dimension_semantics = [#tpu.dimension_semantics<parallel>, #tpu.dimension_semantics<parallel>], iteration_bounds = array<i64: 1, 1>, scalar_prefetch = 0 : i64, scratch_operands = 0 : i64, tpu.core_type = #tpu.core_type<tc>, window_params = [{transform_indices = @transform_0, window_bounds = array<i64: 128, 128>}, {transform_indices = @transform_1, window_bounds = array<i64: 1, 128>}, {transform_indices = @transform_2, window_bounds = array<i64: 1, 128>}, {transform_indices = @transform_3, window_bounds = array<i64: 128, 128>}]} {
    %c0 = arith.constant 0 : index
    %c0_0 = arith.constant 0 : index
    %0 = vector.load %arg2[%c0, %c0_0] : memref<128x128xbf16, #tpu.memory_space<vmem>>, vector<128x128xbf16>
    %1 = arith.extf %0 : vector<128x128xbf16> to vector<128x128xf32>
    %c0_1 = arith.constant 0 : index
    %c0_2 = arith.constant 0 : index
    %2 = vector.load %arg3[%c0_1, %c0_2] : memref<1x128xf32, #tpu.memory_space<vmem>>, vector<1x128xf32>
    %3 = vector.broadcast %2 : vector<1x128xf32> to vector<128x128xf32>
    %4 = arith.mulf %1, %3 : vector<128x128xf32>
    %c0_3 = arith.constant 0 : index
    %c0_4 = arith.constant 0 : index
    %5 = vector.load %arg4[%c0_3, %c0_4] : memref<1x128xf32, #tpu.memory_space<vmem>>, vector<1x128xf32>
    %6 = vector.broadcast %5 : vector<1x128xf32> to vector<128x128xf32>
    %7 = arith.addf %4, %6 : vector<128x128xf32>
    %cst = arith.constant 0.000000e+00 : f32
    %8 = vector.broadcast %cst : f32 to vector<128x128xf32>
    %9 = arith.maximumf %7, %8 : vector<128x128xf32>
    %10 = arith.truncf %9 : vector<128x128xf32> to vector<128x128xbf16>
    %c0_5 = arith.constant 0 : index
    %c0_6 = arith.constant 0 : index
    %11 = vector.load %arg5[%c0_5, %c0_6] : memref<128x128xbf16, #tpu.memory_space<vmem>>, vector<128x128xbf16>
    tpu.vector_store %arg5[%c0_5, %c0_6], %10 {strides = array<i32>} : memref<128x128xbf16, #tpu.memory_space<vmem>>, vector<128x128xbf16>,
    return
  }
  func.func @transform_0(%arg0: i32, %arg1: i32) -> (i32, i32) {
    %c0_i32 = arith.constant 0 : i32
    return %arg0, %arg1 : i32, i32
  }
  func.func @transform_1(%arg0: i32, %arg1: i32) -> (i32, i32) {
    %c0_i32 = arith.constant 0 : i32
    %c0_i32_0 = arith.constant 0 : i32
    return %c0_i32, %arg1 : i32, i32
  }
  func.func @transform_2(%arg0: i32, %arg1: i32) -> (i32, i32) {
    %c0_i32 = arith.constant 0 : i32
    %c0_i32_0 = arith.constant 0 : i32
    return %c0_i32, %arg1 : i32, i32
  }
  func.func @transform_3(%arg0: i32, %arg1: i32) -> (i32, i32) {
    %c0_i32 = arith.constant 0 : i32
    return %arg0, %arg1 : i32, i32
  }
}

module attributes {stable_mosaic.version = 11 : i64} {
  func.func @_mm_stats_kernel(%arg0: i32, %arg1: i32, %arg2: memref<16x128xbf16, #tpu.memory_space<vmem>>, %arg3: memref<128x128xbf16, #tpu.memory_space<vmem>>, %arg4: memref<16x128xbf16, #tpu.memory_space<vmem>>, %arg5: memref<1x8x128xf32, #tpu.memory_space<vmem>>) attributes {dimension_semantics = [#tpu.dimension_semantics<parallel>, #tpu.dimension_semantics<parallel>], iteration_bounds = array<i64: 1, 1>, scalar_prefetch = 0 : i64, scratch_operands = 0 : i64, tpu.core_type = #tpu.core_type<tc>, window_params = [{transform_indices = @transform_0, window_bounds = array<i64: 16, 128>}, {transform_indices = @transform_1, window_bounds = array<i64: 128, 128>}, {transform_indices = @transform_2, window_bounds = array<i64: 16, 128>}, {transform_indices = @transform_3, window_bounds = array<i64: 1, 8, 128>}]} {
    %c0 = arith.constant 0 : index
    %c0_0 = arith.constant 0 : index
    %0 = vector.load %arg2[%c0, %c0_0] : memref<16x128xbf16, #tpu.memory_space<vmem>>, vector<16x128xbf16>
    %c0_1 = arith.constant 0 : index
    %c0_2 = arith.constant 0 : index
    %1 = vector.load %arg3[%c0_1, %c0_2] : memref<128x128xbf16, #tpu.memory_space<vmem>>, vector<128x128xbf16>
    %cst = arith.constant dense<0.000000e+00> : vector<16x128xf32>
    %2 = tpu.matmul %0, %1, %cst {dimension_numbers = #tpu.dot_dimension_numbers<[1], [0], [0], [1], [0, 0, 1, 1], [], []>} : vector<16x128xbf16>, vector<128x128xbf16>, vector<16x128xf32> -> vector<16x128xf32>
    %3 = arith.truncf %2 : vector<16x128xf32> to vector<16x128xbf16>
    %c0_3 = arith.constant 0 : index
    %c0_4 = arith.constant 0 : index
    %4 = vector.load %arg4[%c0_3, %c0_4] : memref<16x128xbf16, #tpu.memory_space<vmem>>, vector<16x128xbf16>
    tpu.vector_store %arg4[%c0_3, %c0_4], %3 {strides = array<i32>} : memref<16x128xbf16, #tpu.memory_space<vmem>>, vector<16x128xbf16>,
    %cst_5 = arith.constant dense<0.000000e+00> : vector<128xf32>
    %5 = vector.multi_reduction <add>, %2, %cst_5 [0] : vector<16x128xf32> to vector<128xf32>
    %6 = vector.shape_cast %5 : vector<128xf32> to vector<1x128xf32>
    %7 = arith.mulf %2, %2 : vector<16x128xf32>
    %cst_6 = arith.constant dense<0.000000e+00> : vector<128xf32>
    %8 = vector.multi_reduction <add>, %7, %cst_6 [0] : vector<16x128xf32> to vector<128xf32>
    %9 = vector.shape_cast %8 : vector<128xf32> to vector<1x128xf32>
    %10 = tpu.iota {dimensions = array<i32: 0>} : vector<8x128xi32>
    %c0_i32 = arith.constant 0 : i32
    %11 = vector.broadcast %c0_i32 : i32 to vector<8x128xi32>
    %12 = arith.cmpi eq, %10, %11 : vector<8x128xi32>
    %cst_7 = arith.constant 0.000000e+00 : f32
    %13 = vector.shape_cast %6 : vector<1x128xf32> to vector<1x128xf32>
    %14 = vector.broadcast %13 : vector<1x128xf32> to vector<8x128xf32>
    %15 = vector.broadcast %cst_7 : f32 to vector<8x128xf32>
    %16 = arith.select %12, %14, %15 : vector<8x128xi1>, vector<8x128xf32>
    %c1_i32 = arith.constant 1 : i32
    %17 = vector.broadcast %c1_i32 : i32 to vector<8x128xi32>
    %18 = arith.cmpi eq, %10, %17 : vector<8x128xi32>
    %cst_8 = arith.constant 0.000000e+00 : f32
    %19 = vector.shape_cast %9 : vector<1x128xf32> to vector<1x128xf32>
    %20 = vector.broadcast %19 : vector<1x128xf32> to vector<8x128xf32>
    %21 = vector.broadcast %cst_8 : f32 to vector<8x128xf32>
    %22 = arith.select %18, %20, %21 : vector<8x128xi1>, vector<8x128xf32>
    %23 = arith.addf %16, %22 : vector<8x128xf32>
    %24 = vector.shape_cast %23 : vector<8x128xf32> to vector<1x8x128xf32>
    %c0_9 = arith.constant 0 : index
    %c0_10 = arith.constant 0 : index
    %c0_11 = arith.constant 0 : index
    %25 = vector.load %arg5[%c0_9, %c0_10, %c0_11] : memref<1x8x128xf32, #tpu.memory_space<vmem>>, vector<1x8x128xf32>
    tpu.vector_store %arg5[%c0_9, %c0_10, %c0_11], %24 {strides = array<i32>} : memref<1x8x128xf32, #tpu.memory_space<vmem>>, vector<1x8x128xf32>,
    return
  }
  func.func @transform_0(%arg0: i32, %arg1: i32) -> (i32, i32) {
    %c0_i32 = arith.constant 0 : i32
    %c0_i32_0 = arith.constant 0 : i32
    return %arg0, %c0_i32 : i32, i32
  }
  func.func @transform_1(%arg0: i32, %arg1: i32) -> (i32, i32) {
    %c0_i32 = arith.constant 0 : i32
    %c0_i32_0 = arith.constant 0 : i32
    return %c0_i32, %arg1 : i32, i32
  }
  func.func @transform_2(%arg0: i32, %arg1: i32) -> (i32, i32) {
    %c0_i32 = arith.constant 0 : i32
    return %arg0, %arg1 : i32, i32
  }
  func.func @transform_3(%arg0: i32, %arg1: i32) -> (i32, i32, i32) {
    %c0_i32 = arith.constant 0 : i32
    %c0_i32_0 = arith.constant 0 : i32
    return %arg0, %c0_i32, %arg1 : i32, i32, i32
  }
}

module attributes {stable_mosaic.version = 11 : i64} {
  func.func @_scale_shift_relu_kernel(%arg0: i32, %arg1: i32, %arg2: memref<16x128xbf16, #tpu.memory_space<vmem>>, %arg3: memref<1x128xf32, #tpu.memory_space<vmem>>, %arg4: memref<1x128xf32, #tpu.memory_space<vmem>>, %arg5: memref<16x128xbf16, #tpu.memory_space<vmem>>) attributes {dimension_semantics = [#tpu.dimension_semantics<parallel>, #tpu.dimension_semantics<parallel>], iteration_bounds = array<i64: 1, 1>, scalar_prefetch = 0 : i64, scratch_operands = 0 : i64, tpu.core_type = #tpu.core_type<tc>, window_params = [{transform_indices = @transform_0, window_bounds = array<i64: 16, 128>}, {transform_indices = @transform_1, window_bounds = array<i64: 1, 128>}, {transform_indices = @transform_2, window_bounds = array<i64: 1, 128>}, {transform_indices = @transform_3, window_bounds = array<i64: 16, 128>}]} {
    %c0 = arith.constant 0 : index
    %c0_0 = arith.constant 0 : index
    %0 = vector.load %arg2[%c0, %c0_0] : memref<16x128xbf16, #tpu.memory_space<vmem>>, vector<16x128xbf16>
    %1 = arith.extf %0 : vector<16x128xbf16> to vector<16x128xf32>
    %c0_1 = arith.constant 0 : index
    %c0_2 = arith.constant 0 : index
    %2 = vector.load %arg3[%c0_1, %c0_2] : memref<1x128xf32, #tpu.memory_space<vmem>>, vector<1x128xf32>
    %3 = vector.broadcast %2 : vector<1x128xf32> to vector<16x128xf32>
    %4 = arith.mulf %1, %3 : vector<16x128xf32>
    %c0_3 = arith.constant 0 : index
    %c0_4 = arith.constant 0 : index
    %5 = vector.load %arg4[%c0_3, %c0_4] : memref<1x128xf32, #tpu.memory_space<vmem>>, vector<1x128xf32>
    %6 = vector.broadcast %5 : vector<1x128xf32> to vector<16x128xf32>
    %7 = arith.addf %4, %6 : vector<16x128xf32>
    %cst = arith.constant 0.000000e+00 : f32
    %8 = vector.broadcast %cst : f32 to vector<16x128xf32>
    %9 = arith.maximumf %7, %8 : vector<16x128xf32>
    %10 = arith.truncf %9 : vector<16x128xf32> to vector<16x128xbf16>
    %c0_5 = arith.constant 0 : index
    %c0_6 = arith.constant 0 : index
    %11 = vector.load %arg5[%c0_5, %c0_6] : memref<16x128xbf16, #tpu.memory_space<vmem>>, vector<16x128xbf16>
    tpu.vector_store %arg5[%c0_5, %c0_6], %10 {strides = array<i32>} : memref<16x128xbf16, #tpu.memory_space<vmem>>, vector<16x128xbf16>,
    return
  }
  func.func @transform_0(%arg0: i32, %arg1: i32) -> (i32, i32) {
    %c0_i32 = arith.constant 0 : i32
    return %arg0, %arg1 : i32, i32
  }
  func.func @transform_1(%arg0: i32, %arg1: i32) -> (i32, i32) {
    %c0_i32 = arith.constant 0 : i32
    %c0_i32_0 = arith.constant 0 : i32
    return %c0_i32, %arg1 : i32, i32
  }
  func.func @transform_2(%arg0: i32, %arg1: i32) -> (i32, i32) {
    %c0_i32 = arith.constant 0 : i32
    %c0_i32_0 = arith.constant 0 : i32
    return %c0_i32, %arg1 : i32, i32
  }
  func.func @transform_3(%arg0: i32, %arg1: i32) -> (i32, i32) {
    %c0_i32 = arith.constant 0 : i32
    return %arg0, %arg1 : i32, i32
  }
}

module attributes {stable_mosaic.version = 11 : i64} {
  func.func @kernel(%arg0: memref<2x32xbf16, #tpu.memory_space<vmem>>, %arg1: memref<32x128xbf16, #tpu.memory_space<vmem>>, %arg2: memref<1x128xf32, #tpu.memory_space<vmem>>, %arg3: memref<1x128xf32, #tpu.memory_space<vmem>>, %arg4: memref<128x128xbf16, #tpu.memory_space<vmem>>, %arg5: memref<1x128xf32, #tpu.memory_space<vmem>>, %arg6: memref<1x128xf32, #tpu.memory_space<vmem>>, %arg7: memref<128x128xbf16, #tpu.memory_space<vmem>>, %arg8: memref<1x128xf32, #tpu.memory_space<vmem>>, %arg9: memref<2x128xf32, #tpu.memory_space<vmem>>) attributes {dimension_semantics = [], scalar_prefetch = 0 : i64, scratch_operands = 0 : i64, tpu.core_type = #tpu.core_type<tc>} {
    %c0 = arith.constant 0 : index
    %c0_0 = arith.constant 0 : index
    %0 = vector.load %arg0[%c0, %c0_0] : memref<2x32xbf16, #tpu.memory_space<vmem>>, vector<2x32xbf16>
    %c0_1 = arith.constant 0 : index
    %c0_2 = arith.constant 0 : index
    %1 = vector.load %arg1[%c0_1, %c0_2] : memref<32x128xbf16, #tpu.memory_space<vmem>>, vector<32x128xbf16>
    %cst = arith.constant dense<0.000000e+00> : vector<2x128xf32>
    %2 = tpu.matmul %0, %1, %cst {dimension_numbers = #tpu.dot_dimension_numbers<[1], [0], [0], [1], [0, 0, 1, 1], [], []>} : vector<2x32xbf16>, vector<32x128xbf16>, vector<2x128xf32> -> vector<2x128xf32>
    %c0_3 = arith.constant 0 : index
    %c0_4 = arith.constant 0 : index
    %3 = vector.load %arg2[%c0_3, %c0_4] : memref<1x128xf32, #tpu.memory_space<vmem>>, vector<1x128xf32>
    %c0_5 = arith.constant 0 : index
    %c0_6 = arith.constant 0 : index
    %4 = vector.load %arg3[%c0_5, %c0_6] : memref<1x128xf32, #tpu.memory_space<vmem>>, vector<1x128xf32>
    %cst_7 = arith.constant dense<0.000000e+00> : vector<128xf32>
    %5 = vector.multi_reduction <add>, %2, %cst_7 [0] : vector<2x128xf32> to vector<128xf32>
    %6 = vector.shape_cast %5 : vector<128xf32> to vector<1x128xf32>
    %cst_8 = arith.constant 5.000000e-01 : f32
    %7 = vector.broadcast %cst_8 : f32 to vector<1x128xf32>
    %8 = arith.mulf %6, %7 : vector<1x128xf32>
    %9 = arith.mulf %2, %2 : vector<2x128xf32>
    %cst_9 = arith.constant dense<0.000000e+00> : vector<128xf32>
    %10 = vector.multi_reduction <add>, %9, %cst_9 [0] : vector<2x128xf32> to vector<128xf32>
    %11 = vector.shape_cast %10 : vector<128xf32> to vector<1x128xf32>
    %cst_10 = arith.constant 5.000000e-01 : f32
    %12 = vector.broadcast %cst_10 : f32 to vector<1x128xf32>
    %13 = arith.mulf %11, %12 : vector<1x128xf32>
    %14 = arith.mulf %8, %8 : vector<1x128xf32>
    %15 = arith.subf %13, %14 : vector<1x128xf32>
    %cst_11 = arith.constant 0.000000e+00 : f32
    %16 = vector.broadcast %cst_11 : f32 to vector<1x128xf32>
    %17 = arith.maximumf %15, %16 : vector<1x128xf32>
    %cst_12 = arith.constant 9.99999974E-6 : f32
    %18 = vector.broadcast %cst_12 : f32 to vector<1x128xf32>
    %19 = arith.addf %17, %18 : vector<1x128xf32>
    %20 = math.rsqrt %19 : vector<1x128xf32>
    %21 = arith.mulf %3, %20 : vector<1x128xf32>
    %22 = arith.mulf %8, %21 : vector<1x128xf32>
    %23 = arith.subf %4, %22 : vector<1x128xf32>
    %24 = vector.broadcast %21 : vector<1x128xf32> to vector<2x128xf32>
    %25 = arith.mulf %2, %24 : vector<2x128xf32>
    %26 = vector.broadcast %23 : vector<1x128xf32> to vector<2x128xf32>
    %27 = arith.addf %25, %26 : vector<2x128xf32>
    %cst_13 = arith.constant 0.000000e+00 : f32
    %28 = vector.broadcast %cst_13 : f32 to vector<2x128xf32>
    %29 = arith.maximumf %27, %28 : vector<2x128xf32>
    %30 = arith.truncf %29 : vector<2x128xf32> to vector<2x128xbf16>
    %c0_14 = arith.constant 0 : index
    %c0_15 = arith.constant 0 : index
    %31 = vector.load %arg4[%c0_14, %c0_15] : memref<128x128xbf16, #tpu.memory_space<vmem>>, vector<128x128xbf16>
    %cst_16 = arith.constant dense<0.000000e+00> : vector<2x128xf32>
    %32 = tpu.matmul %30, %31, %cst_16 {dimension_numbers = #tpu.dot_dimension_numbers<[1], [0], [0], [1], [0, 0, 1, 1], [], []>} : vector<2x128xbf16>, vector<128x128xbf16>, vector<2x128xf32> -> vector<2x128xf32>
    %c0_17 = arith.constant 0 : index
    %c0_18 = arith.constant 0 : index
    %33 = vector.load %arg5[%c0_17, %c0_18] : memref<1x128xf32, #tpu.memory_space<vmem>>, vector<1x128xf32>
    %c0_19 = arith.constant 0 : index
    %c0_20 = arith.constant 0 : index
    %34 = vector.load %arg6[%c0_19, %c0_20] : memref<1x128xf32, #tpu.memory_space<vmem>>, vector<1x128xf32>
    %cst_21 = arith.constant dense<0.000000e+00> : vector<128xf32>
    %35 = vector.multi_reduction <add>, %32, %cst_21 [0] : vector<2x128xf32> to vector<128xf32>
    %36 = vector.shape_cast %35 : vector<128xf32> to vector<1x128xf32>
    %cst_22 = arith.constant 5.000000e-01 : f32
    %37 = vector.broadcast %cst_22 : f32 to vector<1x128xf32>
    %38 = arith.mulf %36, %37 : vector<1x128xf32>
    %39 = arith.mulf %32, %32 : vector<2x128xf32>
    %cst_23 = arith.constant dense<0.000000e+00> : vector<128xf32>
    %40 = vector.multi_reduction <add>, %39, %cst_23 [0] : vector<2x128xf32> to vector<128xf32>
    %41 = vector.shape_cast %40 : vector<128xf32> to vector<1x128xf32>
    %cst_24 = arith.constant 5.000000e-01 : f32
    %42 = vector.broadcast %cst_24 : f32 to vector<1x128xf32>
    %43 = arith.mulf %41, %42 : vector<1x128xf32>
    %44 = arith.mulf %38, %38 : vector<1x128xf32>
    %45 = arith.subf %43, %44 : vector<1x128xf32>
    %cst_25 = arith.constant 0.000000e+00 : f32
    %46 = vector.broadcast %cst_25 : f32 to vector<1x128xf32>
    %47 = arith.maximumf %45, %46 : vector<1x128xf32>
    %cst_26 = arith.constant 9.99999974E-6 : f32
    %48 = vector.broadcast %cst_26 : f32 to vector<1x128xf32>
    %49 = arith.addf %47, %48 : vector<1x128xf32>
    %50 = math.rsqrt %49 : vector<1x128xf32>
    %51 = arith.mulf %33, %50 : vector<1x128xf32>
    %52 = arith.mulf %38, %51 : vector<1x128xf32>
    %53 = arith.subf %34, %52 : vector<1x128xf32>
    %54 = vector.broadcast %51 : vector<1x128xf32> to vector<2x128xf32>
    %55 = arith.mulf %32, %54 : vector<2x128xf32>
    %56 = vector.broadcast %53 : vector<1x128xf32> to vector<2x128xf32>
    %57 = arith.addf %55, %56 : vector<2x128xf32>
    %cst_27 = arith.constant 0.000000e+00 : f32
    %58 = vector.broadcast %cst_27 : f32 to vector<2x128xf32>
    %59 = arith.maximumf %57, %58 : vector<2x128xf32>
    %60 = arith.truncf %59 : vector<2x128xf32> to vector<2x128xbf16>
    %c0_28 = arith.constant 0 : index
    %c0_29 = arith.constant 0 : index
    %61 = vector.load %arg7[%c0_28, %c0_29] : memref<128x128xbf16, #tpu.memory_space<vmem>>, vector<128x128xbf16>
    %cst_30 = arith.constant dense<0.000000e+00> : vector<2x128xf32>
    %62 = tpu.matmul %60, %61, %cst_30 {dimension_numbers = #tpu.dot_dimension_numbers<[1], [0], [0], [1], [0, 0, 1, 1], [], []>} : vector<2x128xbf16>, vector<128x128xbf16>, vector<2x128xf32> -> vector<2x128xf32>
    %c0_31 = arith.constant 0 : index
    %c0_32 = arith.constant 0 : index
    %63 = vector.load %arg8[%c0_31, %c0_32] : memref<1x128xf32, #tpu.memory_space<vmem>>, vector<1x128xf32>
    %64 = vector.broadcast %63 : vector<1x128xf32> to vector<2x128xf32>
    %65 = arith.addf %62, %64 : vector<2x128xf32>
    %c0_33 = arith.constant 0 : index
    %c0_34 = arith.constant 0 : index
    %66 = vector.load %arg9[%c0_33, %c0_34] : memref<2x128xf32, #tpu.memory_space<vmem>>, vector<2x128xf32>
    tpu.vector_store %arg9[%c0_33, %c0_34], %65 {strides = array<i32>} : memref<2x128xf32, #tpu.memory_space<vmem>>, vector<2x128xf32>,
    return
  }
}

</mosaic_0001>

<llo_original>
// kernel: disease_classifier_forward.5
$region0: #{disease_classifier_forward.5}
  #allocation0 [shape = 'u32[]', space=smem, size = 0x4, offset = 0x4, fixed_abs, tag = 'smem constant byte address 0x4 - core index']
  #allocation1 [shape = 'u32[72,128]{1,0:T(1,128)}', space=vmem, size = 0x9000, scoped, tag = 'internal scratch']
  %s0 = inlined_call_operand.vmem [shape: bf16[128,128], index: 0, kind: input, shape index: {}]
  %s1 = inlined_call_operand.vmem [shape: bf16[128,128], index: 1, kind: input, shape index: {}]
  %s2 = inlined_call_operand.vmem [shape: bf16[128,128], index: 2, kind: output, shape index: {0}]
  %s3 = inlined_call_operand.vmem [shape: f32[1,8,128], index: 3, kind: output, shape index: {1}]
  %4 = xla_tuple %s2, %s3
  %s5 = sld [smem:[#allocation0]]
  $region26: #{disease_classifier_forward.5} parent=0
    _
  %s7 = ssub.s32 1, %s5
  %s8 = scalar_select 0, %s7, %s5
  // Predicated region
  $region2: #{disease_classifier_forward.5} parent=0 // pred_check
    _
  $region3: #{disease_classifier_forward.5} parent=0 // pred_check_branch
    %10 = sbr.rel (0) target = $region5
  $region4: #{disease_classifier_forward.5} parent=0 // pred_region
    _
  $region5: #{disease_classifier_forward.5} parent=0 // pred_fallthru
    _
  // Predicated region
  $region6: #{disease_classifier_forward.5} parent=0 // pred_check
    _
  $region7: #{disease_classifier_forward.5} parent=0 // pred_check_branch
    %12 = sbr.rel (0) target = $region9
  $region8: #{disease_classifier_forward.5} parent=0 // pred_region
    _
  $region9: #{disease_classifier_forward.5} parent=0 // pred_fallthru
    _
  %v13 = vld [vmem:[%s0] sm:$0xf]
  %v14 = vld [vmem:[%s0 + $0x4] sm:$0xf]
  %v15 = vld [vmem:[%s0 + $0x8] sm:$0xf]
  %v16 = vld [vmem:[%s0 + $0xc] sm:$0xf]
  %v17 = vld [vmem:[%s0 + $0x10] sm:$0xf]
  %v18 = vld [vmem:[%s0 + $0x14] sm:$0xf]
  %v19 = vld [vmem:[%s0 + $0x18] sm:$0xf]
  %v20 = vld [vmem:[%s0 + $0x1c] sm:$0xf]
  %v21 = vld [vmem:[%s0 + $0x20] sm:$0xf]
  %v22 = vld [vmem:[%s0 + $0x24] sm:$0xf]
  %v23 = vld [vmem:[%s0 + $0x28] sm:$0xf]
  %v24 = vld [vmem:[%s0 + $0x2c] sm:$0xf]
  %v25 = vld [vmem:[%s0 + $0x30] sm:$0xf]
  %v26 = vld [vmem:[%s0 + $0x34] sm:$0xf]
  %v27 = vld [vmem:[%s0 + $0x38] sm:$0xf]
  %v28 = vld [vmem:[%s0 + $0x3c] sm:$0xf]
  %v29 = vld [vmem:[%s1] sm:$0xf]
  %v30 = vld [vmem:[%s1 + $0x4] sm:$0xf]
  %v31 = vld [vmem:[%s1 + $0x8] sm:$0xf]
  %v32 = vld [vmem:[%s1 + $0xc] sm:$0xf]
  %v33 = vld [vmem:[%s1 + $0x10] sm:$0xf]
  %v34 = vld [vmem:[%s1 + $0x14] sm:$0xf]
  %v35 = vld [vmem:[%s1 + $0x18] sm:$0xf]
  %v36 = vld [vmem:[%s1 + $0x1c] sm:$0xf]
  %v37 = vld [vmem:[%s1 + $0x20] sm:$0xf]
  %v38 = vld [vmem:[%s1 + $0x24] sm:$0xf]
  %v39 = vld [vmem:[%s1 + $0x28] sm:$0xf]
  %v40 = vld [vmem:[%s1 + $0x2c] sm:$0xf]
  %v41 = vld [vmem:[%s1 + $0x30] sm:$0xf]
  %v42 = vld [vmem:[%s1 + $0x34] sm:$0xf]
  %v43 = vld [vmem:[%s1 + $0x38] sm:$0xf]
  %v44 = vld [vmem:[%s1 + $0x3c] sm:$0xf]
  %v61 = vunpack.c.l.b16 %v13
  %v62 = vunpack.c.l.b16 %v14
  %v63 = vunpack.c.l.b16 %v15
  %v64 = vunpack.c.l.b16 %v16
  %v65 = vunpack.c.l.b16 %v17
  %v66 = vunpack.c.l.b16 %v18
  %v67 = vunpack.c.l.b16 %v19
  %v68 = vunpack.c.l.b16 %v20
  %v69 = vunpack.c.l.b16 %v21
  %v70 = vunpack.c.l.b16 %v22
  %v71 = vunpack.c.l.b16 %v23
  %v72 = vunpack.c.l.b16 %v24
  %v73 = vunpack.c.l.b16 %v25
  %v74 = vunpack.c.l.b16 %v26
  %v75 = vunpack.c.l.b16 %v27
  %v76 = vunpack.c.l.b16 %v28
  %v77 = vpack.c.b16 %v62, %v61
  %v78 = vpack.c.b16 %v64, %v63
  %v79 = vpack.c.b16 %v66, %v65
  %v80 = vpack.c.b16 %v68, %v67
  %v81 = vpack.c.b16 %v70, %v69
  %v82 = vpack.c.b16 %v72, %v71
  %v83 = vpack.c.b16 %v74, %v73
  %v84 = vpack.c.b16 %v76, %v75
  %v109 = vunpack.c.l.b16 %v29
  %v110 = vunpack.c.l.b16 %v30
  %v111 = vunpack.c.l.b16 %v31
  %v112 = vunpack.c.l.b16 %v32
  %v113 = vunpack.c.l.b16 %v33
  %v114 = vunpack.c.l.b16 %v34
  %v115 = vunpack.c.l.b16 %v35
  %v116 = vunpack.c.l.b16 %v36
  %v117 = vunpack.c.l.b16 %v37
  %v118 = vunpack.c.l.b16 %v38
  %v119 = vunpack.c.l.b16 %v39
  %v120 = vunpack.c.l.b16 %v40
  %v121 = vunpack.c.l.b16 %v41
  %v122 = vunpack.c.l.b16 %v42
  %v123 = vunpack.c.l.b16 %v43
  %v124 = vunpack.c.l.b16 %v44
  %v125 = vpack.c.b16 %v110, %v109
  %v126 = vpack.c.b16 %v112, %v111
  %v127 = vpack.c.b16 %v114, %v113
  %v128 = vpack.c.b16 %v116, %v115
  %v129 = vpack.c.b16 %v118, %v117
  %v130 = vpack.c.b16 %v120, %v119
  %v131 = vpack.c.b16 %v122, %v121
  %v132 = vpack.c.b16 %v124, %v123
  %141 = vmatpush.bf16.msra.mxu0 %v132
  %142 = vmatpush.bf16.msra.mxu0 %v131
  %143 = vmatpush.bf16.msra.mxu0 %v130
  %144 = vmatpush.bf16.msra.mxu0 %v129
  %145 = vmatpush.bf16.msra.mxu0 %v128
  %146 = vmatpush.bf16.msra.mxu0 %v127
  %147 = vmatpush.bf16.msra.mxu0 %v126
  %148 = vmatpush.bf16.msra.mxu0 %v125
  %149 = vmatmul.bf16.gmra.mxu0 %v77
  %v150 = vpop.f32.mrf.mxu0
  %v151 = vadd.f32 0.0, %v150
  %v152 = vpop.f32.mrf.mxu0
  %v153 = vadd.f32 0.0, %v152
  %154 = vmatmul.bf16.gmra.mxu0 %v78
  %v155 = vpop.f32.mrf.mxu0
  %v156 = vadd.f32 0.0, %v155
  %v157 = vpop.f32.mrf.mxu0
  %v158 = vadd.f32 0.0, %v157
  %159 = vmatmul.bf16.gmra.mxu0 %v79
  %v160 = vpop.f32.mrf.mxu0
  %v161 = vadd.f32 0.0, %v160
  %v162 = vpop.f32.mrf.mxu0
  %v163 = vadd.f32 0.0, %v162
  %164 = vmatmul.bf16.gmra.mxu0 %v80
  %v165 = vpop.f32.mrf.mxu0
  %v166 = vadd.f32 0.0, %v165
  %v167 = vpop.f32.mrf.mxu0
  %v168 = vadd.f32 0.0, %v167
  %169 = vmatmul.bf16.gmra.mxu0 %v81
  %v170 = vpop.f32.mrf.mxu0
  %v171 = vadd.f32 0.0, %v170
  %v172 = vpop.f32.mrf.mxu0
  %v173 = vadd.f32 0.0, %v172
  %174 = vmatmul.bf16.gmra.mxu0 %v82
  %v175 = vpop.f32.mrf.mxu0
  %v176 = vadd.f32 0.0, %v175
  %v177 = vpop.f32.mrf.mxu0
  %v178 = vadd.f32 0.0, %v177
  %179 = vmatmul.bf16.gmra.mxu0 %v83
  %v180 = vpop.f32.mrf.mxu0
  %v181 = vadd.f32 0.0, %v180
  %v182 = vpop.f32.mrf.mxu0
  %v183 = vadd.f32 0.0, %v182
  %184 = vmatmul.bf16.gmra.mxu0 %v84
  %v185 = vpop.f32.mrf.mxu0
  %v186 = vadd.f32 0.0, %v185
  %v187 = vpop.f32.mrf.mxu0
  %v188 = vadd.f32 0.0, %v187
  %189 = vdwg.mxu0
  %v190 = vpack.c.bf16 %v151, %v151
  %v191 = vpack.c.bf16 %v153, %v153
  %v192 = vpack.c.bf16 %v156, %v156
  %v193 = vpack.c.bf16 %v158, %v158
  %v194 = vpack.c.bf16 %v161, %v161
  %v195 = vpack.c.bf16 %v163, %v163
  %v196 = vpack.c.bf16 %v166, %v166
  %v197 = vpack.c.bf16 %v168, %v168
  %v198 = vpack.c.bf16 %v171, %v171
  %v199 = vpack.c.bf16 %v173, %v173
  %v200 = vpack.c.bf16 %v176, %v176
  %v201 = vpack.c.bf16 %v178, %v178
  %v202 = vpack.c.bf16 %v181, %v181
  %v203 = vpack.c.bf16 %v183, %v183
  %v204 = vpack.c.bf16 %v186, %v186
  %v205 = vpack.c.bf16 %v188, %v188
  %206 = vst [vmem:[%s2] sm:$0xf] %v190
  %207 = vst [vmem:[%s2 + $0x4] sm:$0xf] %v191
  %208 = vst [vmem:[%s2 + $0x8] sm:$0xf] %v192
  %209 = vst [vmem:[%s2 + $0xc] sm:$0xf] %v193
  %210 = vst [vmem:[%s2 + $0x10] sm:$0xf] %v194
  %211 = vst [vmem:[%s2 + $0x14] sm:$0xf] %v195
  %212 = vst [vmem:[%s2 + $0x18] sm:$0xf] %v196
  %213 = vst [vmem:[%s2 + $0x1c] sm:$0xf] %v197
  %214 = vst [vmem:[%s2 + $0x20] sm:$0xf] %v198
  %215 = vst [vmem:[%s2 + $0x24] sm:$0xf] %v199
  %216 = vst [vmem:[%s2 + $0x28] sm:$0xf] %v200
  %217 = vst [vmem:[%s2 + $0x2c] sm:$0xf] %v201
  %218 = vst [vmem:[%s2 + $0x30] sm:$0xf] %v202
  %219 = vst [vmem:[%s2 + $0x34] sm:$0xf] %v203
  %220 = vst [vmem:[%s2 + $0x38] sm:$0xf] %v204
  %221 = vst [vmem:[%s2 + $0x3c] sm:$0xf] %v205
  %v222 = vadd.f32 %v151, %v153
  %v223 = vadd.f32 %v222, %v156
  %v224 = vadd.f32 %v223, %v158
  %v225 = vadd.f32 %v224, %v161
  %v226 = vadd.f32 %v225, %v163
  %v227 = vadd.f32 %v226, %v166
  %v228 = vadd.f32 %v227, %v168
  %v229 = vadd.f32 %v228, %v171
  %v230 = vadd.f32 %v229, %v173
  %v231 = vadd.f32 %v230, %v176
  %v232 = vadd.f32 %v231, %v178
  %v233 = vadd.f32 %v232, %v181
  %v234 = vadd.f32 %v233, %v183
  %v235 = vadd.f32 %v234, %v186
  %v236 = vadd.f32 %v235, %v188
  %v237 = vrot.slane %v236, 4
  %v238 = vadd.f32 %v236, %v237
  %v239 = vrot.slane %v238, 2
  %v240 = vadd.f32 %v238, %v239
  %v241 = vrot.slane %v240, 1
  %v242 = vadd.f32 %v240, %v241
  %v243 = vmul.f32 %v151, %v151
  %v244 = vmul.f32 %v153, %v153
  %v245 = vmul.f32 %v156, %v156
  %v246 = vmul.f32 %v158, %v158
  %v247 = vmul.f32 %v161, %v161
  %v248 = vmul.f32 %v163, %v163
  %v249 = vmul.f32 %v166, %v166
  %v250 = vmul.f32 %v168, %v168
  %v251 = vmul.f32 %v171, %v171
  %v252 = vmul.f32 %v173, %v173
  %v253 = vmul.f32 %v176, %v176
  %v254 = vmul.f32 %v178, %v178
  %v255 = vmul.f32 %v181, %v181
  %v256 = vmul.f32 %v183, %v183
  %v257 = vmul.f32 %v186, %v186
  %v258 = vmul.f32 %v188, %v188
  %v259 = vadd.f32 %v243, %v244
  %v260 = vadd.f32 %v259, %v245
  %v261 = vadd.f32 %v260, %v246
  %v262 = vadd.f32 %v261, %v247
  %v263 = vadd.f32 %v262, %v248
  %v264 = vadd.f32 %v263, %v249
  %v265 = vadd.f32 %v264, %v250
  %v266 = vadd.f32 %v265, %v251
  %v267 = vadd.f32 %v266, %v252
  %v268 = vadd.f32 %v267, %v253
  %v269 = vadd.f32 %v268, %v254
  %v270 = vadd.f32 %v269, %v255
  %v271 = vadd.f32 %v270, %v256
  %v272 = vadd.f32 %v271, %v257
  %v273 = vadd.f32 %v272, %v258
  %v274 = vrot.slane %v273, 4
  %v275 = vadd.f32 %v273, %v274
  %v276 = vrot.slane %v275, 2
  %v277 = vadd.f32 %v275, %v276
  %v278 = vrot.slane %v277, 1
  %v279 = vadd.f32 %v277, %v278
  %v280 = vlaneseq
  %v281 = vshrl.u32 %v280, 7
  %vm282 = vcmp.eq.s32.totalorder %v281, 0
  %v283 = vsel %vm282, %v242, 0.0
  %vm284 = vcmp.eq.s32.totalorder %v281, 1
  %v285 = vsel %vm284, %v279, 0.0
  %v286 = vadd.f32 %v283, %v285
  %287 = vst [vmem:[%s3] sm:$0xff] %v286
  // Predicated region
  $region10: #{disease_classifier_forward.5} parent=0 // pred_check
    _
  $region11: #{disease_classifier_forward.5} parent=0 // pred_check_branch
    %289 = sbr.rel (0) target = $region13
  $region12: #{disease_classifier_forward.5} parent=0 // pred_region
    _
  $region13: #{disease_classifier_forward.5} parent=0 // pred_fallthru
    _
  // Predicated region
  $region14: #{disease_classifier_forward.5} parent=0 // pred_check
    _
  $region15: #{disease_classifier_forward.5} parent=0 // pred_check_branch
    %291 = sbr.rel (0) target = $region17
  $region16: #{disease_classifier_forward.5} parent=0 // pred_region
    _
  $region17: #{disease_classifier_forward.5} parent=0 // pred_fallthru
    _
  // Predicated region
  $region18: #{disease_classifier_forward.5} parent=0 // pred_check
    _
  $region19: #{disease_classifier_forward.5} parent=0 // pred_check_branch
    %293 = sbr.rel (0) target = $region21
  $region20: #{disease_classifier_forward.5} parent=0 // pred_region
    _
  $region21: #{disease_classifier_forward.5} parent=0 // pred_fallthru
    _
  // Predicated region
  $region22: #{disease_classifier_forward.5} parent=0 // pred_check
    _
  $region23: #{disease_classifier_forward.5} parent=0 // pred_check_branch
    %295 = sbr.rel (0) target = $region25
  $region24: #{disease_classifier_forward.5} parent=0 // pred_region
    _
  $region25: #{disease_classifier_forward.5} parent=0 // pred_fallthru
    _

// kernel: disease_classifier_forward.6
$region0: #{disease_classifier_forward.6}
  #allocation0 [shape = 'u32[]', space=smem, size = 0x4, offset = 0x4, fixed_abs, tag = 'smem constant byte address 0x4 - core index']
  #allocation1 [shape = 'u32[72,128]{1,0:T(1,128)}', space=vmem, size = 0x9000, scoped, tag = 'internal scratch']
  %s0 = inlined_call_operand.vmem [shape: bf16[128,128], index: 0, kind: input, shape index: {}]
  %s1 = inlined_call_operand.vmem [shape: f32[1,128], index: 1, kind: input, shape index: {}]
  %s2 = inlined_call_operand.vmem [shape: f32[1,128], index: 2, kind: input, shape index: {}]
  %s3 = inlined_call_operand.vmem [shape: bf16[128,128], index: 3, kind: output, shape index: {}]
  %s4 = sld [smem:[#allocation0]]
  $region22: #{disease_classifier_forward.6} parent=0
    _
  %s6 = ssub.s32 1, %s4
  %s7 = scalar_select 0, %s6, %s4
  // Predicated region
  $region2: #{disease_classifier_forward.6} parent=0 // pred_check
    _
  $region3: #{disease_classifier_forward.6} parent=0 // pred_check_branch
    %9 = sbr.rel (0) target = $region5
  $region4: #{disease_classifier_forward.6} parent=0 // pred_region
    _
  $region5: #{disease_classifier_forward.6} parent=0 // pred_fallthru
    _
  // Predicated region
  $region6: #{disease_classifier_forward.6} parent=0 // pred_check
    _
  $region7: #{disease_classifier_forward.6} parent=0 // pred_check_branch
    %11 = sbr.rel (0) target = $region9
  $region8: #{disease_classifier_forward.6} parent=0 // pred_region
    _
  $region9: #{disease_classifier_forward.6} parent=0 // pred_fallthru
    _
  // Predicated region
  $region10: #{disease_classifier_forward.6} parent=0 // pred_check
    _
  $region11: #{disease_classifier_forward.6} parent=0 // pred_check_branch
    %13 = sbr.rel (0) target = $region13
  $region12: #{disease_classifier_forward.6} parent=0 // pred_region
    _
  $region13: #{disease_classifier_forward.6} parent=0 // pred_fallthru
    _
  %v14 = vld [vmem:[%s0] sm:$0xf]
  %v15 = vld [vmem:[%s0 + $0x4] sm:$0xf]
  %v16 = vld [vmem:[%s0 + $0x8] sm:$0xf]
  %v17 = vld [vmem:[%s0 + $0xc] sm:$0xf]
  %v18 = vld [vmem:[%s0 + $0x10] sm:$0xf]
  %v19 = vld [vmem:[%s0 + $0x14] sm:$0xf]
  %v20 = vld [vmem:[%s0 + $0x18] sm:$0xf]
  %v21 = vld [vmem:[%s0 + $0x1c] sm:$0xf]
  %v22 = vld [vmem:[%s0 + $0x20] sm:$0xf]
  %v23 = vld [vmem:[%s0 + $0x24] sm:$0xf]
  %v24 = vld [vmem:[%s0 + $0x28] sm:$0xf]
  %v25 = vld [vmem:[%s0 + $0x2c] sm:$0xf]
  %v26 = vld [vmem:[%s0 + $0x30] sm:$0xf]
  %v27 = vld [vmem:[%s0 + $0x34] sm:$0xf]
  %v28 = vld [vmem:[%s0 + $0x38] sm:$0xf]
  %v29 = vld [vmem:[%s0 + $0x3c] sm:$0xf]
  %v30 = vunpack.c.l.bf16 %v14
  %v31 = vunpack.c.l.bf16 %v15
  %v32 = vunpack.c.l.bf16 %v16
  %v33 = vunpack.c.l.bf16 %v17
  %v34 = vunpack.c.l.bf16 %v18
  %v35 = vunpack.c.l.bf16 %v19
  %v36 = vunpack.c.l.bf16 %v20
  %v37 = vunpack.c.l.bf16 %v21
  %v38 = vunpack.c.l.bf16 %v22
  %v39 = vunpack.c.l.bf16 %v23
  %v40 = vunpack.c.l.bf16 %v24
  %v41 = vunpack.c.l.bf16 %v25
  %v42 = vunpack.c.l.bf16 %v26
  %v43 = vunpack.c.l.bf16 %v27
  %v44 = vunpack.c.l.bf16 %v28
  %v45 = vunpack.c.l.bf16 %v29
  %v46 = vld [vmem:[%s1] sm:$0x1]
  %v48 = vperm.slane %v46, 0
  %v50 = vmul.f32 %v30, %v48
  %v51 = vmul.f32 %v31, %v48
  %v52 = vmul.f32 %v32, %v48
  %v53 = vmul.f32 %v33, %v48
  %v54 = vmul.f32 %v34, %v48
  %v55 = vmul.f32 %v35, %v48
  %v56 = vmul.f32 %v36, %v48
  %v57 = vmul.f32 %v37, %v48
  %v58 = vmul.f32 %v38, %v48
  %v59 = vmul.f32 %v39, %v48
  %v60 = vmul.f32 %v40, %v48
  %v61 = vmul.f32 %v41, %v48
  %v62 = vmul.f32 %v42, %v48
  %v63 = vmul.f32 %v43, %v48
  %v64 = vmul.f32 %v44, %v48
  %v65 = vmul.f32 %v45, %v48
  %v66 = vld [vmem:[%s2] sm:$0x1]
  %v68 = vperm.slane %v66, 0
  %v70 = vadd.f32 %v50, %v68
  %v71 = vadd.f32 %v51, %v68
  %v72 = vadd.f32 %v52, %v68
  %v73 = vadd.f32 %v53, %v68
  %v74 = vadd.f32 %v54, %v68
  %v75 = vadd.f32 %v55, %v68
  %v76 = vadd.f32 %v56, %v68
  %v77 = vadd.f32 %v57, %v68
  %v78 = vadd.f32 %v58, %v68
  %v79 = vadd.f32 %v59, %v68
  %v80 = vadd.f32 %v60, %v68
  %v81 = vadd.f32 %v61, %v68
  %v82 = vadd.f32 %v62, %v68
  %v83 = vadd.f32 %v63, %v68
  %v84 = vadd.f32 %v64, %v68
  %v85 = vadd.f32 %v65, %v68
  %v86 = vmax.f32 %v70, 0.0
  %v87 = vmax.f32 %v71, 0.0
  %v88 = vmax.f32 %v72, 0.0
  %v89 = vmax.f32 %v73, 0.0
  %v90 = vmax.f32 %v74, 0.0
  %v91 = vmax.f32 %v75, 0.0
  %v92 = vmax.f32 %v76, 0.0
  %v93 = vmax.f32 %v77, 0.0
  %v94 = vmax.f32 %v78, 0.0
  %v95 = vmax.f32 %v79, 0.0
  %v96 = vmax.f32 %v80, 0.0
  %v97 = vmax.f32 %v81, 0.0
  %v98 = vmax.f32 %v82, 0.0
  %v99 = vmax.f32 %v83, 0.0
  %v100 = vmax.f32 %v84, 0.0
  %v101 = vmax.f32 %v85, 0.0
  %v102 = vpack.c.bf16 %v86, %v86
  %v103 = vpack.c.bf16 %v87, %v87
  %v104 = vpack.c.bf16 %v88, %v88
  %v105 = vpack.c.bf16 %v89, %v89
  %v106 = vpack.c.bf16 %v90, %v90
  %v107 = vpack.c.bf16 %v91, %v91
  %v108 = vpack.c.bf16 %v92, %v92
  %v109 = vpack.c.bf16 %v93, %v93
  %v110 = vpack.c.bf16 %v94, %v94
  %v111 = vpack.c.bf16 %v95, %v95
  %v112 = vpack.c.bf16 %v96, %v96
  %v113 = vpack.c.bf16 %v97, %v97
  %v114 = vpack.c.bf16 %v98, %v98
  %v115 = vpack.c.bf16 %v99, %v99
  %v116 = vpack.c.bf16 %v100, %v100
  %v117 = vpack.c.bf16 %v101, %v101
  %118 = vst [vmem:[%s3] sm:$0xf] %v102
  %119 = vst [vmem:[%s3 + $0x4] sm:$0xf] %v103
  %120 = vst [vmem:[%s3 + $0x8] sm:$0xf] %v104
  %121 = vst [vmem:[%s3 + $0xc] sm:$0xf] %v105
  %122 = vst [vmem:[%s3 + $0x10] sm:$0xf] %v106
  %123 = vst [vmem:[%s3 + $0x14] sm:$0xf] %v107
  %124 = vst [vmem:[%s3 + $0x18] sm:$0xf] %v108
  %125 = vst [vmem:[%s3 + $0x1c] sm:$0xf] %v109
  %126 = vst [vmem:[%s3 + $0x20] sm:$0xf] %v110
  %127 = vst [vmem:[%s3 + $0x24] sm:$0xf] %v111
  %128 = vst [vmem:[%s3 + $0x28] sm:$0xf] %v112
  %129 = vst [vmem:[%s3 + $0x2c] sm:$0xf] %v113
  %130 = vst [vmem:[%s3 + $0x30] sm:$0xf] %v114
  %131 = vst [vmem:[%s3 + $0x34] sm:$0xf] %v115
  %132 = vst [vmem:[%s3 + $0x38] sm:$0xf] %v116
  %133 = vst [vmem:[%s3 + $0x3c] sm:$0xf] %v117
  // Predicated region
  $region14: #{disease_classifier_forward.6} parent=0 // pred_check
    _
  $region15: #{disease_classifier_forward.6} parent=0 // pred_check_branch
    %135 = sbr.rel (0) target = $region17
  $region16: #{disease_classifier_forward.6} parent=0 // pred_region
    _
  $region17: #{disease_classifier_forward.6} parent=0 // pred_fallthru
    _
  // Predicated region
  $region18: #{disease_classifier_forward.6} parent=0 // pred_check
    _
  $region19: #{disease_classifier_forward.6} parent=0 // pred_check_branch
    %137 = sbr.rel (0) target = $region21
  $region20: #{disease_classifier_forward.6} parent=0 // pred_region
    _
  $region21: #{disease_classifier_forward.6} parent=0 // pred_fallthru
    _

// kernel: disease_classifier_forward.7
$region0: #{disease_classifier_forward.7}
  #allocation0 [shape = 'u32[]', space=smem, size = 0x4, offset = 0x4, fixed_abs, tag = 'smem constant byte address 0x4 - core index']
  #allocation1 [shape = 'u32[72,128]{1,0:T(1,128)}', space=vmem, size = 0x9000, scoped, tag = 'internal scratch']
  %s0 = inlined_call_operand.vmem [shape: bf16[16,128], index: 0, kind: input, shape index: {}]
  %s1 = inlined_call_operand.vmem [shape: bf16[128,128], index: 1, kind: input, shape index: {}]
  %s2 = inlined_call_operand.vmem [shape: bf16[16,128], index: 2, kind: output, shape index: {0}]
  %s3 = inlined_call_operand.vmem [shape: f32[1,8,128], index: 3, kind: output, shape index: {1}]
  %4 = xla_tuple %s2, %s3
  %s5 = sld [smem:[#allocation0]]
  $region26: #{disease_classifier_forward.7} parent=0
    _
  %s7 = ssub.s32 1, %s5
  %s8 = scalar_select 0, %s7, %s5
  // Predicated region
  $region2: #{disease_classifier_forward.7} parent=0 // pred_check
    _
  $region3: #{disease_classifier_forward.7} parent=0 // pred_check_branch
    %10 = sbr.rel (0) target = $region5
  $region4: #{disease_classifier_forward.7} parent=0 // pred_region
    _
  $region5: #{disease_classifier_forward.7} parent=0 // pred_fallthru
    _
  // Predicated region
  $region6: #{disease_classifier_forward.7} parent=0 // pred_check
    _
  $region7: #{disease_classifier_forward.7} parent=0 // pred_check_branch
    %12 = sbr.rel (0) target = $region9
  $region8: #{disease_classifier_forward.7} parent=0 // pred_region
    _
  $region9: #{disease_classifier_forward.7} parent=0 // pred_fallthru
    _
  %v13 = vld [vmem:[%s0] sm:$0xf]
  %v14 = vld [vmem:[%s0 + $0x4] sm:$0xf]
  %v15 = vld [vmem:[%s1] sm:$0xf]
  %v16 = vld [vmem:[%s1 + $0x4] sm:$0xf]
  %v17 = vld [vmem:[%s1 + $0x8] sm:$0xf]
  %v18 = vld [vmem:[%s1 + $0xc] sm:$0xf]
  %v19 = vld [vmem:[%s1 + $0x10] sm:$0xf]
  %v20 = vld [vmem:[%s1 + $0x14] sm:$0xf]
  %v21 = vld [vmem:[%s1 + $0x18] sm:$0xf]
  %v22 = vld [vmem:[%s1 + $0x1c] sm:$0xf]
  %v23 = vld [vmem:[%s1 + $0x20] sm:$0xf]
  %v24 = vld [vmem:[%s1 + $0x24] sm:$0xf]
  %v25 = vld [vmem:[%s1 + $0x28] sm:$0xf]
  %v26 = vld [vmem:[%s1 + $0x2c] sm:$0xf]
  %v27 = vld [vmem:[%s1 + $0x30] sm:$0xf]
  %v28 = vld [vmem:[%s1 + $0x34] sm:$0xf]
  %v29 = vld [vmem:[%s1 + $0x38] sm:$0xf]
  %v30 = vld [vmem:[%s1 + $0x3c] sm:$0xf]
  %v33 = vunpack.c.l.b16 %v13
  %v34 = vunpack.c.l.b16 %v14
  %v35 = vpack.c.b16 %v34, %v33
  %v53 = vunpack.c.l.b16 %v15
  %v54 = vunpack.c.l.b16 %v16
  %v55 = vunpack.c.l.b16 %v17
  %v56 = vunpack.c.l.b16 %v18
  %v57 = vunpack.c.l.b16 %v19
  %v58 = vunpack.c.l.b16 %v20
  %v59 = vunpack.c.l.b16 %v21
  %v60 = vunpack.c.l.b16 %v22
  %v61 = vunpack.c.l.b16 %v23
  %v62 = vunpack.c.l.b16 %v24
  %v63 = vunpack.c.l.b16 %v25
  %v64 = vunpack.c.l.b16 %v26
  %v65 = vunpack.c.l.b16 %v27
  %v66 = vunpack.c.l.b16 %v28
  %v67 = vunpack.c.l.b16 %v29
  %v68 = vunpack.c.l.b16 %v30
  %v69 = vpack.c.b16 %v54, %v53
  %v70 = vpack.c.b16 %v56, %v55
  %v71 = vpack.c.b16 %v58, %v57
  %v72 = vpack.c.b16 %v60, %v59
  %v73 = vpack.c.b16 %v62, %v61
  %v74 = vpack.c.b16 %v64, %v63
  %v75 = vpack.c.b16 %v66, %v65
  %v76 = vpack.c.b16 %v68, %v67
  %85 = vmatpush.bf16.msra.mxu0 %v76
  %86 = vmatpush.bf16.msra.mxu0 %v75
  %87 = vmatpush.bf16.msra.mxu0 %v74
  %88 = vmatpush.bf16.msra.mxu0 %v73
  %89 = vmatpush.bf16.msra.mxu0 %v72
  %90 = vmatpush.bf16.msra.mxu0 %v71
  %91 = vmatpush.bf16.msra.mxu0 %v70
  %92 = vmatpush.bf16.msra.mxu0 %v69
  %93 = vmatmul.bf16.gmra.mxu0 %v35
  %v94 = vpop.f32.mrf.mxu0
  %v95 = vadd.f32 0.0, %v94
  %v96 = vpop.f32.mrf.mxu0
  %v97 = vadd.f32 0.0, %v96
  %98 = vdwg.mxu0
  %v99 = vpack.c.bf16 %v95, %v95
  %v100 = vpack.c.bf16 %v97, %v97
  %101 = vst [vmem:[%s2] sm:$0xf] %v99
  %102 = vst [vmem:[%s2 + $0x4] sm:$0xf] %v100
  %v103 = vadd.f32 %v95, %v97
  %v104 = vrot.slane %v103, 4
  %v105 = vadd.f32 %v103, %v104
  %v106 = vrot.slane %v105, 2
  %v107 = vadd.f32 %v105, %v106
  %v108 = vrot.slane %v107, 1
  %v109 = vadd.f32 %v107, %v108
  %v110 = vmul.f32 %v95, %v95
  %v111 = vmul.f32 %v97, %v97
  %v112 = vadd.f32 %v110, %v111
  %v113 = vrot.slane %v112, 4
  %v114 = vadd.f32 %v112, %v113
  %v115 = vrot.slane %v114, 2
  %v116 = vadd.f32 %v114, %v115
  %v117 = vrot.slane %v116, 1
  %v118 = vadd.f32 %v116, %v117
  %v119 = vlaneseq
  %v120 = vshrl.u32 %v119, 7
  %vm121 = vcmp.eq.s32.totalorder %v120, 0
  %v122 = vsel %vm121, %v109, 0.0
  %vm123 = vcmp.eq.s32.totalorder %v120, 1
  %v124 = vsel %vm123, %v118, 0.0
  %v125 = vadd.f32 %v122, %v124
  %126 = vst [vmem:[%s3] sm:$0xff] %v125
  // Predicated region
  $region10: #{disease_classifier_forward.7} parent=0 // pred_check
    _
  $region11: #{disease_classifier_forward.7} parent=0 // pred_check_branch
    %128 = sbr.rel (0) target = $region13
  $region12: #{disease_classifier_forward.7} parent=0 // pred_region
    _
  $region13: #{disease_classifier_forward.7} parent=0 // pred_fallthru
    _
  // Predicated region
  $region14: #{disease_classifier_forward.7} parent=0 // pred_check
    _
  $region15: #{disease_classifier_forward.7} parent=0 // pred_check_branch
    %130 = sbr.rel (0) target = $region17
  $region16: #{disease_classifier_forward.7} parent=0 // pred_region
    _
  $region17: #{disease_classifier_forward.7} parent=0 // pred_fallthru
    _
  // Predicated region
  $region18: #{disease_classifier_forward.7} parent=0 // pred_check
    _
  $region19: #{disease_classifier_forward.7} parent=0 // pred_check_branch
    %132 = sbr.rel (0) target = $region21
  $region20: #{disease_classifier_forward.7} parent=0 // pred_region
    _
  $region21: #{disease_classifier_forward.7} parent=0 // pred_fallthru
    _
  // Predicated region
  $region22: #{disease_classifier_forward.7} parent=0 // pred_check
    _
  $region23: #{disease_classifier_forward.7} parent=0 // pred_check_branch
    %134 = sbr.rel (0) target = $region25
  $region24: #{disease_classifier_forward.7} parent=0 // pred_region
    _
  $region25: #{disease_classifier_forward.7} parent=0 // pred_fallthru
    _

// kernel: disease_classifier_forward.8
$region0: #{disease_classifier_forward.8}
  #allocation0 [shape = 'u32[]', space=smem, size = 0x4, offset = 0x4, fixed_abs, tag = 'smem constant byte address 0x4 - core index']
  #allocation1 [shape = 'u32[72,128]{1,0:T(1,128)}', space=vmem, size = 0x9000, scoped, tag = 'internal scratch']
  %s0 = inlined_call_operand.vmem [shape: bf16[16,128], index: 0, kind: input, shape index: {}]
  %s1 = inlined_call_operand.vmem [shape: f32[1,128], index: 1, kind: input, shape index: {}]
  %s2 = inlined_call_operand.vmem [shape: f32[1,128], index: 2, kind: input, shape index: {}]
  %s3 = inlined_call_operand.vmem [shape: bf16[16,128], index: 3, kind: output, shape index: {}]
  %s4 = sld [smem:[#allocation0]]
  $region22: #{disease_classifier_forward.8} parent=0
    _
  %s6 = ssub.s32 1, %s4
  %s7 = scalar_select 0, %s6, %s4
  // Predicated region
  $region2: #{disease_classifier_forward.8} parent=0 // pred_check
    _
  $region3: #{disease_classifier_forward.8} parent=0 // pred_check_branch
    %9 = sbr.rel (0) target = $region5
  $region4: #{disease_classifier_forward.8} parent=0 // pred_region
    _
  $region5: #{disease_classifier_forward.8} parent=0 // pred_fallthru
    _
  // Predicated region
  $region6: #{disease_classifier_forward.8} parent=0 // pred_check
    _
  $region7: #{disease_classifier_forward.8} parent=0 // pred_check_branch
    %11 = sbr.rel (0) target = $region9
  $region8: #{disease_classifier_forward.8} parent=0 // pred_region
    _
  $region9: #{disease_classifier_forward.8} parent=0 // pred_fallthru
    _
  // Predicated region
  $region10: #{disease_classifier_forward.8} parent=0 // pred_check
    _
  $region11: #{disease_classifier_forward.8} parent=0 // pred_check_branch
    %13 = sbr.rel (0) target = $region13
  $region12: #{disease_classifier_forward.8} parent=0 // pred_region
    _
  $region13: #{disease_classifier_forward.8} parent=0 // pred_fallthru
    _
  %v14 = vld [vmem:[%s0] sm:$0xf]
  %v15 = vld [vmem:[%s0 + $0x4] sm:$0xf]
  %v16 = vunpack.c.l.bf16 %v14
  %v17 = vunpack.c.l.bf16 %v15
  %v18 = vld [vmem:[%s1] sm:$0x1]
  %v20 = vperm.slane %v18, 0
  %v22 = vmul.f32 %v16, %v20
  %v23 = vmul.f32 %v17, %v20
  %v24 = vld [vmem:[%s2] sm:$0x1]
  %v26 = vperm.slane %v24, 0
  %v28 = vadd.f32 %v22, %v26
  %v29 = vadd.f32 %v23, %v26
  %v30 = vmax.f32 %v28, 0.0
  %v31 = vmax.f32 %v29, 0.0
  %v32 = vpack.c.bf16 %v30, %v30
  %v33 = vpack.c.bf16 %v31, %v31
  %34 = vst [vmem:[%s3] sm:$0xf] %v32
  %35 = vst [vmem:[%s3 + $0x4] sm:$0xf] %v33
  // Predicated region
  $region14: #{disease_classifier_forward.8} parent=0 // pred_check
    _
  $region15: #{disease_classifier_forward.8} parent=0 // pred_check_branch
    %37 = sbr.rel (0) target = $region17
  $region16: #{disease_classifier_forward.8} parent=0 // pred_region
    _
  $region17: #{disease_classifier_forward.8} parent=0 // pred_fallthru
    _
  // Predicated region
  $region18: #{disease_classifier_forward.8} parent=0 // pred_check
    _
  $region19: #{disease_classifier_forward.8} parent=0 // pred_check_branch
    %39 = sbr.rel (0) target = $region21
  $region20: #{disease_classifier_forward.8} parent=0 // pred_region
    _
  $region21: #{disease_classifier_forward.8} parent=0 // pred_fallthru
    _

// kernel: disease_classifier_forward.9
$region0: #{disease_classifier_forward.9}
  #allocation0 [shape = 'u32[]', space=smem, size = 0x4, offset = 0x4, fixed_abs, tag = 'smem constant byte address 0x4 - core index']
  #allocation1 [shape = 'u32[72,128]{1,0:T(1,128)}', space=vmem, size = 0x9000, scoped, tag = 'internal scratch']
  %s0 = inlined_call_operand.vmem [shape: bf16[2,32], index: 0, kind: input, shape index: {}]
  %s1 = inlined_call_operand.vmem [shape: bf16[32,128], index: 1, kind: input, shape index: {}]
  %s2 = inlined_call_operand.vmem [shape: f32[1,128], index: 2, kind: input, shape index: {}]
  %s3 = inlined_call_operand.vmem [shape: f32[1,128], index: 3, kind: input, shape index: {}]
  %s4 = inlined_call_operand.vmem [shape: bf16[128,128], index: 4, kind: input, shape index: {}]
  %s5 = inlined_call_operand.vmem [shape: f32[1,128], index: 5, kind: input, shape index: {}]
  %s6 = inlined_call_operand.vmem [shape: f32[1,128], index: 6, kind: input, shape index: {}]
  %s7 = inlined_call_operand.vmem [shape: bf16[128,128], index: 7, kind: input, shape index: {}]
  %s8 = inlined_call_operand.vmem [shape: f32[1,128], index: 8, kind: input, shape index: {}]
  %s9 = inlined_call_operand.vmem [shape: f32[2,128], index: 9, kind: output, shape index: {}]
  %s10 = sld [smem:[#allocation0]]
  $region46: #{disease_classifier_forward.9} parent=0
    _
  %s12 = ssub.s32 1, %s10
  %s13 = scalar_select 0, %s12, %s10
  // Predicated region
  $region2: #{disease_classifier_forward.9} parent=0 // pred_check
    _
  $region3: #{disease_classifier_forward.9} parent=0 // pred_check_branch
    %15 = sbr.rel (0) target = $region5
  $region4: #{disease_classifier_forward.9} parent=0 // pred_region
    _
  $region5: #{disease_classifier_forward.9} parent=0 // pred_fallthru
    _
  // Predicated region
  $region6: #{disease_classifier_forward.9} parent=0 // pred_check
    _
  $region7: #{disease_classifier_forward.9} parent=0 // pred_check_branch
    %17 = sbr.rel (0) target = $region9
  $region8: #{disease_classifier_forward.9} parent=0 // pred_region
    _
  $region9: #{disease_classifier_forward.9} parent=0 // pred_fallthru
    _
  // Predicated region
  $region10: #{disease_classifier_forward.9} parent=0 // pred_check
    _
  $region11: #{disease_classifier_forward.9} parent=0 // pred_check_branch
    %19 = sbr.rel (0) target = $region13
  $region12: #{disease_classifier_forward.9} parent=0 // pred_region
    _
  $region13: #{disease_classifier_forward.9} parent=0 // pred_fallthru
    _
  // Predicated region
  $region14: #{disease_classifier_forward.9} parent=0 // pred_check
    _
  $region15: #{disease_classifier_forward.9} parent=0 // pred_check_branch
    %21 = sbr.rel (0) target = $region17
  $region16: #{disease_classifier_forward.9} parent=0 // pred_region
    _
  $region17: #{disease_classifier_forward.9} parent=0 // pred_fallthru
    _
  // Predicated region
  $region18: #{disease_classifier_forward.9} parent=0 // pred_check
    _
  $region19: #{disease_classifier_forward.9} parent=0 // pred_check_branch
    %23 = sbr.rel (0) target = $region21
  $region20: #{disease_classifier_forward.9} parent=0 // pred_region
    _
  $region21: #{disease_classifier_forward.9} parent=0 // pred_fallthru
    _
  // Predicated region
  $region22: #{disease_classifier_forward.9} parent=0 // pred_check
    _
  $region23: #{disease_classifier_forward.9} parent=0 // pred_check_branch
    %25 = sbr.rel (0) target = $region25
  $region24: #{disease_classifier_forward.9} parent=0 // pred_region
    _
  $region25: #{disease_classifier_forward.9} parent=0 // pred_fallthru
    _
  // Predicated region
  $region26: #{disease_classifier_forward.9} parent=0 // pred_check
    _
  $region27: #{disease_classifier_forward.9} parent=0 // pred_check_branch
    %27 = sbr.rel (0) target = $region29
  $region28: #{disease_classifier_forward.9} parent=0 // pred_region
    _
  $region29: #{disease_classifier_forward.9} parent=0 // pred_fallthru
    _
  // Predicated region
  $region30: #{disease_classifier_forward.9} parent=0 // pred_check
    _
  $region31: #{disease_classifier_forward.9} parent=0 // pred_check_branch
    %29 = sbr.rel (0) target = $region33
  $region32: #{disease_classifier_forward.9} parent=0 // pred_region
    _
  $region33: #{disease_classifier_forward.9} parent=0 // pred_fallthru
    _
  // Predicated region
  $region34: #{disease_classifier_forward.9} parent=0 // pred_check
    _
  $region35: #{disease_classifier_forward.9} parent=0 // pred_check_branch
    %31 = sbr.rel (0) target = $region37
  $region36: #{disease_classifier_forward.9} parent=0 // pred_region
    _
  $region37: #{disease_classifier_forward.9} parent=0 // pred_fallthru
    _
  %v33 = vld [vmem:[%s0] sm:$0x1]
  %v34 = vld [vmem:[%s1] sm:$0xf]
  %v35 = vld [vmem:[%s1 + $0x4] sm:$0xf]
  %v36 = vld [vmem:[%s1 + $0x8] sm:$0xf]
  %v37 = vld [vmem:[%s1 + $0xc] sm:$0xf]
  %v42 = vunpack.c.l.b16 %v34
  %v43 = vunpack.c.l.b16 %v35
  %v44 = vunpack.c.l.b16 %v36
  %v45 = vunpack.c.l.b16 %v37
  %v46 = vpack.c.b16 %v43, %v42
  %v47 = vpack.c.b16 %v45, %v44
  %vm50 = vcmask 261120
  %v52 = vsel %vm50, %v33, 0
  %54 = vmatpush.bf16.msra.mxu0 0
  %55 = vmatpush.bf16.msra.mxu0 0
  %56 = vmatpush.bf16.msra.mxu0 0
  %57 = vmatpush.bf16.msra.mxu0 0
  %58 = vmatpush.bf16.msra.mxu0 0
  %59 = vmatpush.bf16.msra.mxu0 0
  %60 = vmatpush.bf16.msra.mxu0 %v47
  %61 = vmatpush.bf16.msra.mxu0 %v46
  %62 = vmatmul.bf16.gmra.mxu0 %v52
  %v63 = vpop.f32.mrf.mxu0
  %v64 = vadd.f32 0.0, %v63
  %v65 = vpop.f32.mrf.mxu0
  %66 = vdwg.mxu0
  %v67 = vld [vmem:[%s2] sm:$0x1]
  %v68 = vld [vmem:[%s3] sm:$0x1]
  %vm69 = vcmask 1041408
  %v70 = vsel %vm69, %v64, 0.0
  %v71 = vrot.slane %v70, 4
  %v72 = vadd.f32 %v70, %v71
  %v73 = vrot.slane %v72, 2
  %v74 = vadd.f32 %v72, %v73
  %v75 = vrot.slane %v74, 1
  %v76 = vadd.f32 %v74, %v75
  %v77 = vmul.f32 %v76, 0.5
  %v78 = vmul.f32 %v64, %v64
  %v79 = vsel %vm69, %v78, 0.0
  %v80 = vrot.slane %v79, 4
  %v81 = vadd.f32 %v79, %v80
  %v82 = vrot.slane %v81, 2
  %v83 = vadd.f32 %v81, %v82
  %v84 = vrot.slane %v83, 1
  %v85 = vadd.f32 %v83, %v84
  %v86 = vmul.f32 %v85, 0.5
  %v87 = vmul.f32 %v77, %v77
  %v88 = vsub.f32 %v86, %v87
  %v89 = vmax.f32 %v88, 0.0
  %v90 = vadd.f32 %v89, 1e-05
  %v91 = vrsqrt.pop %v90
  %v92 = vmul.f32 %v91, %v90
  %v93 = vmul.f32 %v92, %v91
  %v94 = vmul.f32 0.5, %v93
  %v95 = vsub.f32 1.5, %v94
  %v96 = vmul.f32 %v91, %v95
  %vm97 = vweird.f32 %v90
  %vm98 = vweird.f32 %v91
  %vm99 = vmor %vm97, %vm98
  %v100 = vsel %vm99, %v91, %v96
  %v101 = vmul.f32 %v67, %v100
  %v102 = vmul.f32 %v77, %v101
  %v103 = vsub.f32 %v68, %v102
  %v105 = vperm.slane %v101, 0
  %v107 = vmul.f32 %v64, %v105
  %v109 = vperm.slane %v103, 0
  %v111 = vadd.f32 %v107, %v109
  %v112 = vmax.f32 %v111, 0.0
  %v113 = vpack.c.bf16 %v112, %v112
  %v114 = vld [vmem:[%s4] sm:$0xf]
  %v115 = vld [vmem:[%s4 + $0x4] sm:$0xf]
  %v116 = vld [vmem:[%s4 + $0x8] sm:$0xf]
  %v117 = vld [vmem:[%s4 + $0xc] sm:$0xf]
  %v118 = vld [vmem:[%s4 + $0x10] sm:$0xf]
  %v119 = vld [vmem:[%s4 + $0x14] sm:$0xf]
  %v120 = vld [vmem:[%s4 + $0x18] sm:$0xf]
  %v121 = vld [vmem:[%s4 + $0x1c] sm:$0xf]
  %v122 = vld [vmem:[%s4 + $0x20] sm:$0xf]
  %v123 = vld [vmem:[%s4 + $0x24] sm:$0xf]
  %v124 = vld [vmem:[%s4 + $0x28] sm:$0xf]
  %v125 = vld [vmem:[%s4 + $0x2c] sm:$0xf]
  %v126 = vld [vmem:[%s4 + $0x30] sm:$0xf]
  %v127 = vld [vmem:[%s4 + $0x34] sm:$0xf]
  %v128 = vld [vmem:[%s4 + $0x38] sm:$0xf]
  %v129 = vld [vmem:[%s4 + $0x3c] sm:$0xf]
  %v146 = vunpack.c.l.b16 %v114
  %v147 = vunpack.c.l.b16 %v115
  %v148 = vunpack.c.l.b16 %v116
  %v149 = vunpack.c.l.b16 %v117
  %v150 = vunpack.c.l.b16 %v118
  %v151 = vunpack.c.l.b16 %v119
  %v152 = vunpack.c.l.b16 %v120
  %v153 = vunpack.c.l.b16 %v121
  %v154 = vunpack.c.l.b16 %v122
  %v155 = vunpack.c.l.b16 %v123
  %v156 = vunpack.c.l.b16 %v124
  %v157 = vunpack.c.l.b16 %v125
  %v158 = vunpack.c.l.b16 %v126
  %v159 = vunpack.c.l.b16 %v127
  %v160 = vunpack.c.l.b16 %v128
  %v161 = vunpack.c.l.b16 %v129
  %v162 = vpack.c.b16 %v147, %v146
  %v163 = vpack.c.b16 %v149, %v148
  %v164 = vpack.c.b16 %v151, %v150
  %v165 = vpack.c.b16 %v153, %v152
  %v166 = vpack.c.b16 %v155, %v154
  %v167 = vpack.c.b16 %v157, %v156
  %v168 = vpack.c.b16 %v159, %v158
  %v169 = vpack.c.b16 %v161, %v160
  %178 = vmatpush.bf16.msra.mxu0 %v169
  %179 = vmatpush.bf16.msra.mxu0 %v168
  %180 = vmatpush.bf16.msra.mxu0 %v167
  %181 = vmatpush.bf16.msra.mxu0 %v166
  %182 = vmatpush.bf16.msra.mxu0 %v165
  %183 = vmatpush.bf16.msra.mxu0 %v164
  %184 = vmatpush.bf16.msra.mxu0 %v163
  %185 = vmatpush.bf16.msra.mxu0 %v162
  %186 = vmatmul.bf16.gmra.mxu0 %v113
  %v187 = vpop.f32.mrf.mxu0
  %v188 = vadd.f32 0.0, %v187
  %v189 = vpop.f32.mrf.mxu0
  %190 = vdwg.mxu0
  %v191 = vld [vmem:[%s5] sm:$0x1]
  %v192 = vld [vmem:[%s6] sm:$0x1]
  %v193 = vsel %vm69, %v188, 0.0
  %v194 = vrot.slane %v193, 4
  %v195 = vadd.f32 %v193, %v194
  %v196 = vrot.slane %v195, 2
  %v197 = vadd.f32 %v195, %v196
  %v198 = vrot.slane %v197, 1
  %v199 = vadd.f32 %v197, %v198
  %v200 = vmul.f32 %v199, 0.5
  %v201 = vmul.f32 %v188, %v188
  %v202 = vsel %vm69, %v201, 0.0
  %v203 = vrot.slane %v202, 4
  %v204 = vadd.f32 %v202, %v203
  %v205 = vrot.slane %v204, 2
  %v206 = vadd.f32 %v204, %v205
  %v207 = vrot.slane %v206, 1
  %v208 = vadd.f32 %v206, %v207
  %v209 = vmul.f32 %v208, 0.5
  %v210 = vmul.f32 %v200, %v200
  %v211 = vsub.f32 %v209, %v210
  %v212 = vmax.f32 %v211, 0.0
  %v213 = vadd.f32 %v212, 1e-05
  %v214 = vrsqrt.pop %v213
  %v215 = vmul.f32 %v214, %v213
  %v216 = vmul.f32 %v215, %v214
  %v217 = vmul.f32 0.5, %v216
  %v218 = vsub.f32 1.5, %v217
  %v219 = vmul.f32 %v214, %v218
  %vm220 = vweird.f32 %v213
  %vm221 = vweird.f32 %v214
  %vm222 = vmor %vm220, %vm221
  %v223 = vsel %vm222, %v214, %v219
  %v224 = vmul.f32 %v191, %v223
  %v225 = vmul.f32 %v200, %v224
  %v226 = vsub.f32 %v192, %v225
  %v228 = vperm.slane %v224, 0
  %v230 = vmul.f32 %v188, %v228
  %v232 = vperm.slane %v226, 0
  %v234 = vadd.f32 %v230, %v232
  %v235 = vmax.f32 %v234, 0.0
  %v236 = vpack.c.bf16 %v235, %v235
  %v237 = vld [vmem:[%s7] sm:$0xf]
  %v238 = vld [vmem:[%s7 + $0x4] sm:$0xf]
  %v239 = vld [vmem:[%s7 + $0x8] sm:$0xf]
  %v240 = vld [vmem:[%s7 + $0xc] sm:$0xf]
  %v241 = vld [vmem:[%s7 + $0x10] sm:$0xf]
  %v242 = vld [vmem:[%s7 + $0x14] sm:$0xf]
  %v243 = vld [vmem:[%s7 + $0x18] sm:$0xf]
  %v244 = vld [vmem:[%s7 + $0x1c] sm:$0xf]
  %v245 = vld [vmem:[%s7 + $0x20] sm:$0xf]
  %v246 = vld [vmem:[%s7 + $0x24] sm:$0xf]
  %v247 = vld [vmem:[%s7 + $0x28] sm:$0xf]
  %v248 = vld [vmem:[%s7 + $0x2c] sm:$0xf]
  %v249 = vld [vmem:[%s7 + $0x30] sm:$0xf]
  %v250 = vld [vmem:[%s7 + $0x34] sm:$0xf]
  %v251 = vld [vmem:[%s7 + $0x38] sm:$0xf]
  %v252 = vld [vmem:[%s7 + $0x3c] sm:$0xf]
  %v253 = vld [vmem:[%s8] sm:$0x1]
  %v255 = vperm.slane %v253, 0
  %v273 = vunpack.c.l.b16 %v237
  %v274 = vunpack.c.l.b16 %v238
  %v275 = vunpack.c.l.b16 %v239
  %v276 = vunpack.c.l.b16 %v240
  %v277 = vunpack.c.l.b16 %v241
  %v278 = vunpack.c.l.b16 %v242
  %v279 = vunpack.c.l.b16 %v243
  %v280 = vunpack.c.l.b16 %v244
  %v281 = vunpack.c.l.b16 %v245
  %v282 = vunpack.c.l.b16 %v246
  %v283 = vunpack.c.l.b16 %v247
  %v284 = vunpack.c.l.b16 %v248
  %v285 = vunpack.c.l.b16 %v249
  %v286 = vunpack.c.l.b16 %v250
  %v287 = vunpack.c.l.b16 %v251
  %v288 = vunpack.c.l.b16 %v252
  %v289 = vpack.c.b16 %v274, %v273
  %v290 = vpack.c.b16 %v276, %v275
  %v291 = vpack.c.b16 %v278, %v277
  %v292 = vpack.c.b16 %v280, %v279
  %v293 = vpack.c.b16 %v282, %v281
  %v294 = vpack.c.b16 %v284, %v283
  %v295 = vpack.c.b16 %v286, %v285
  %v296 = vpack.c.b16 %v288, %v287
  %305 = vmatpush.bf16.msra.mxu0 %v296
  %306 = vmatpush.bf16.msra.mxu0 %v295
  %307 = vmatpush.bf16.msra.mxu0 %v294
  %308 = vmatpush.bf16.msra.mxu0 %v293
  %309 = vmatpush.bf16.msra.mxu0 %v292
  %310 = vmatpush.bf16.msra.mxu0 %v291
  %311 = vmatpush.bf16.msra.mxu0 %v290
  %312 = vmatpush.bf16.msra.mxu0 %v289
  %313 = vmatmul.bf16.gmra.mxu0 %v236
  %v314 = vpop.f32.mrf.mxu0
  %v315 = vadd.f32 %v255, %v314
  %v316 = vpop.f32.mrf.mxu0
  %317 = vdwg.mxu0
  %318 = vst [vmem:[%s9] sm:$0x3] %v315
  // Predicated region
  $region38: #{disease_classifier_forward.9} parent=0 // pred_check
    _
  $region39: #{disease_classifier_forward.9} parent=0 // pred_check_branch
    %320 = sbr.rel (0) target = $region41
  $region40: #{disease_classifier_forward.9} parent=0 // pred_region
    _
  $region41: #{disease_classifier_forward.9} parent=0 // pred_fallthru
    _
  // Predicated region
  $region42: #{disease_classifier_forward.9} parent=0 // pred_check
    _
  $region43: #{disease_classifier_forward.9} parent=0 // pred_check_branch
    %322 = sbr.rel (0) target = $region45
  $region44: #{disease_classifier_forward.9} parent=0 // pred_region
    _
  $region45: #{disease_classifier_forward.9} parent=0 // pred_fallthru
    _

</llo_original>
